<compile_context>
chip_gen: v7x
topology: tpu7x:2x2x1
jax: 0.10.0
libtpu: 0.0.40
codegen_flags: <defaults>
</compile_context>

<pallas_src>
import jax
import jax.numpy as jnp
from jax.experimental import pallas as pl
from jax.experimental.pallas import tpu as pltpu

# ----------------------------- config (tiny BERT) -----------------------------
BATCH = 2
MAX_LEN = 16              # sequence length (multiple of 8 sublanes)
VOCAB = 64
NUM_TYPES = 2
HIDDEN = 32
HEADS = 2
HEAD_DIM = HIDDEN // HEADS  # 16
MLP = 64
LN_EPS = 1e-12

PAD_ID, CLS_ID, SEP_ID, UNK_ID = 0, 1, 2, 3

# --------------------- packed weight-slab row layout ---------------------------
# All row offsets are multiples of 16 so bf16 (16,128) tile-aligned sublane
# slices of the weight ref never straddle a packed-row boundary.
TYPE_OFF = VOCAB                 # 64  : token-type rows (2 real + pad to 16)
POS_OFF = VOCAB + 16             # 80  : position rows
TBL_ROWS = POS_OFF + MAX_LEN     # 96  : fused embedding table rows
R_QKV = TBL_ROWS                 # 96  : merged [Wq|Wk|Wv]  (32 rows, 96 cols)
R_WO = R_QKV + HIDDEN            # 128 : output projection  (32 rows, 32 cols)
R_W1 = R_WO + HIDDEN             # 160 : MLP in             (32 rows, 64 cols)
R_W2 = R_W1 + HIDDEN             # 192 : MLP out            (64 rows, 32 cols)
R_WP = R_W2 + MLP                # 256 : pooler             (32 rows, 32 cols)
W_ROWS = R_WP + HIDDEN           # 288
SLAB_W = 128                     # lane-dense slab width

# vec-slab (bias / LayerNorm) row indices
V_LNE_G, V_LNE_B, V_BQKV, V_BO = 0, 1, 2, 3
V_LN1_G, V_LN1_B, V_B1, V_B2 = 4, 5, 6, 7
V_LN2_G, V_LN2_B, V_BP = 8, 9, 10
VEC_ROWS = 16

OUT_W = 128                      # fused output width: [emb | hid | pool | pool]


# ------------------------- toy tokenizer (host glue) --------------------------
# TODO(synk): real HF tokenizers (WordPiece/BPE) are host-side string code with
# no Pallas equivalent; this deterministic word-hash stand-in mirrors the
# interface (input_ids / token_type_ids / attention_mask, padding, truncation).
def _word_to_id(word: str) -> int:
    h = 0
    for ch in word:
        h = (h * 131 + ord(ch)) % (VOCAB - 4)
    return 4 + h


def tokenize(input_text_batch, input_text2_batch=None, padding=True,
             truncation=True, max_length=MAX_LEN):
    batch_ids, batch_tt, batch_mask = [], [], []
    for i, text in enumerate(input_text_batch):
        ids = [CLS_ID] + [_word_to_id(w) for w in text.lower().split()] + [SEP_ID]
        tts = [0] * len(ids)
        if input_text2_batch is not None:
            ids2 = [_word_to_id(w) for w in input_text2_batch[i].lower().split()]
            ids2 = ids2 + [SEP_ID]
            ids += ids2
            tts += [1] * len(ids2)
        if truncation and len(ids) > max_length:
            ids, tts = ids[:max_length], tts[:max_length]
        mask = [1] * len(ids)
        if padding and len(ids) < max_length:
            pad = max_length - len(ids)
            ids += [PAD_ID] * pad
            tts += [0] * pad
            mask += [0] * pad
        batch_ids.append(ids)
        batch_tt.append(tts)
        batch_mask.append(mask)
    return {
        "input_ids": jnp.asarray(batch_ids, jnp.int32),
        "token_type_ids": jnp.asarray(batch_tt, jnp.int32),
        "attention_mask": jnp.asarray(batch_mask, jnp.int32),
    }


# ------------------------------ fused encoder kernel ---------------------------
def _layernorm(x, g, b):
    mu = jnp.mean(x, axis=-1, keepdims=True)
    var = jnp.mean(jnp.square(x - mu), axis=-1, keepdims=True)
    return (x - mu) * jax.lax.rsqrt(var + LN_EPS) * g + b


def _bert_encoder_kernel(tok_ref, maskb_ref, w_ref, vec_ref, out_ref):
    T, D = MAX_LEN, HIDDEN
    f32, bf16 = jnp.float32, jnp.bfloat16

    # biases / LayerNorm params: one small f32 slab, sliced in-register
    vec = vec_ref[...]                                         # (16, 128) f32
    lne_g = vec[V_LNE_G:V_LNE_G + 1, 0:D]
    lne_b = vec[V_LNE_B:V_LNE_B + 1, 0:D]
    bqkv = vec[V_BQKV:V_BQKV + 1, 0:3 * D]
    bo = vec[V_BO:V_BO + 1, 0:D]
    ln1_g = vec[V_LN1_G:V_LN1_G + 1, 0:D]
    ln1_b = vec[V_LN1_B:V_LN1_B + 1, 0:D]
    b1 = vec[V_B1:V_B1 + 1, 0:MLP]
    b2 = vec[V_B2:V_B2 + 1, 0:D]
    ln2_g = vec[V_LN2_G:V_LN2_G + 1, 0:D]
    ln2_b = vec[V_LN2_B:V_LN2_B + 1, 0:D]
    bp = vec[V_BP:V_BP + 1, 0:D]

    tok = tok_ref[...]                                         # (1, T, 2) i32
    ids = tok[0, :, 0:1]                                       # (T, 1)
    tt = tok[0, :, 1:2]                                        # (T, 1)
    maskb = maskb_ref[...].reshape(1, T)                       # (1, T) f32 bias

    # ---- embeddings: fused 3-hot (word + type + position) MXU lookup ----
    rows = jax.lax.broadcasted_iota(jnp.int32, (T, TBL_ROWS), 0)
    cols = jax.lax.broadcasted_iota(jnp.int32, (T, TBL_ROWS), 1)
    hot = ((cols == ids) | (cols == (TYPE_OFF + tt)) | (cols == (POS_OFF + rows)))
    x = jnp.dot(hot.astype(bf16), w_ref[0:TBL_ROWS, 0:D],
                preferred_element_type=f32)                    # (T, D)
    x = _layernorm(x, lne_g, lne_b)
    emb = x

    # ---- multi-head self-attention (post-LN, BERT style), all 2-D matmuls ----
    qkv = jnp.dot(x.astype(bf16), w_ref[R_QKV:R_QKV + D, 0:3 * D],
                  preferred_element_type=f32) + bqkv           # (T, 3D)
    scale = 1.0 / (HEAD_DIM ** 0.5)
    attn = None
    for h in range(HEADS):
        q = qkv[:, h * HEAD_DIM:(h + 1) * HEAD_DIM]            # (T, Dh)
        k = qkv[:, D + h * HEAD_DIM:D + (h + 1) * HEAD_DIM]
        v = qkv[:, 2 * D + h * HEAD_DIM:2 * D + (h + 1) * HEAD_DIM]
        s = jax.lax.dot_general(q.astype(bf16), k.astype(bf16),
                                (((1,), (1,)), ((), ())),
                                preferred_element_type=f32) * scale + maskb
        s = s - jnp.max(s, axis=-1, keepdims=True)
        p = jnp.exp(s)
        # TODO(synk): approx reciprocal (EUP) deviates ~1e-4 rel. from exact div.
        p = p * pl.reciprocal(jnp.sum(p, axis=-1, keepdims=True), approx=True)
        ctx = jnp.dot(p.astype(bf16), v.astype(bf16),
                      preferred_element_type=f32)              # (T, Dh)
        o_h = jnp.dot(ctx.astype(bf16),
                      w_ref[R_WO + h * HEAD_DIM:R_WO + (h + 1) * HEAD_DIM, 0:D],
                      preferred_element_type=f32)              # (T, D)
        attn = o_h if attn is None else attn + o_h
    attn = attn + bo
    x1 = _layernorm(x + attn, ln1_g, ln1_b)

    # ---- MLP ----
    m = jnp.dot(x1.astype(bf16), w_ref[R_W1:R_W1 + D, 0:MLP],
                preferred_element_type=f32) + b1
    # TODO(synk): HF default GELU is the exact erf form; tanh approx ~1e-3 off.
    m = jax.nn.gelu(m, approximate=True)
    m = jnp.dot(m.astype(bf16), w_ref[R_W2:R_W2 + MLP, 0:D],
                preferred_element_type=f32) + b2
    x2 = _layernorm(x1 + m, ln2_g, ln2_b)

    # ---- pooler: computed for every row; wrapper keeps the CLS row ----
    pool = jnp.tanh(jnp.dot(x2.astype(bf16), w_ref[R_WP:R_WP + D, 0:D],
                            preferred_element_type=f32) + bp)  # (T, D)

    # ---- single lane-dense (T, 128) store: [emb | hid | pool | pool] ----
    # (duplicated pool block pads the lanes to 128 without materializing zeros)
    out_ref[0] = jnp.concatenate([emb, x2, pool, pool], axis=1)


# ------------------------------ encoder wrapper --------------------------------
def encode(tokenize_res, packed):
    ids = tokenize_res["input_ids"]                            # (B, T) i32
    tt = tokenize_res["token_type_ids"]
    mask = tokenize_res["attention_mask"].astype(jnp.float32)
    B, T = ids.shape
    D = HIDDEN

    tok = jnp.stack([ids, tt], axis=-1)                        # (B, T, 2) i32
    mask_bias = ((mask - 1.0) * 1e9).reshape(B, 1, T)          # (B, 1, T) f32

    cost = pl.CostEstimate(flops=1_000_000, transcendentals=8_000,
                           bytes_accessed=200_000)

    out = pl.pallas_call(
        _bert_encoder_kernel,
        out_shape=jax.ShapeDtypeStruct((B, T, OUT_W), jnp.float32),
        grid=(B,),
        in_specs=[
            pl.BlockSpec((1, T, 2), lambda b: (b, 0, 0)),
            pl.BlockSpec((1, 1, T), lambda b: (b, 0, 0)),
            pl.BlockSpec((W_ROWS, SLAB_W), lambda b: (0, 0)),
            pl.BlockSpec((VEC_ROWS, SLAB_W), lambda b: (0, 0)),
        ],
        out_specs=pl.BlockSpec((1, T, OUT_W), lambda b: (b, 0, 0)),
        compiler_params=pltpu.CompilerParams(
            dimension_semantics=("parallel",)),
        cost_estimate=cost,
    )(tok, mask_bias, packed["w_slab"], packed["vec_slab"])

    emb_out = out[:, :, 0:D]
    last_hidden = out[:, :, D:2 * D]
    pooled = out[:, 0, 2 * D:3 * D]
    return {
        "last_hidden_state": last_hidden,
        "pooler_output": pooled,
        "hidden_states": (emb_out, last_hidden),   # output_hidden_states=True
    }


# ------------------------------ parameter init / packing -----------------------
def init_params(key):
    ks = jax.random.split(key, 10)
    std = 0.02

    def nrm(k, shape):
        return std * jax.random.normal(k, shape, jnp.float32)

    ones = lambda s: jnp.ones(s, jnp.float32)
    zeros = lambda s: jnp.zeros(s, jnp.float32)

    return {
        # embeddings
        "word_emb": nrm(ks[0], (VOCAB, HIDDEN)),
        "pos_emb": nrm(ks[1], (MAX_LEN, HIDDEN)),
        "type_emb": nrm(ks[2], (NUM_TYPES, HIDDEN)),
        "lne_g": ones((1, HIDDEN)), "lne_b": zeros((1, HIDDEN)),
        # attention (merged-head layout: column block h*HEAD_DIM.. is head h)
        "wq": nrm(ks[3], (HIDDEN, HIDDEN)), "bq": zeros((1, HIDDEN)),
        "wk": nrm(ks[4], (HIDDEN, HIDDEN)), "bk": zeros((1, HIDDEN)),
        "wv": nrm(ks[5], (HIDDEN, HIDDEN)), "bv": zeros((1, HIDDEN)),
        "wo": nrm(ks[6], (HIDDEN, HIDDEN)), "bo": zeros((1, HIDDEN)),
        "ln1_g": ones((1, HIDDEN)), "ln1_b": zeros((1, HIDDEN)),
        # MLP
        "w1": nrm(ks[7], (HIDDEN, MLP)), "b1": zeros((1, MLP)),
        "w2": nrm(ks[8], (MLP, HIDDEN)), "b2": zeros((1, HIDDEN)),
        "ln2_g": ones((1, HIDDEN)), "ln2_b": zeros((1, HIDDEN)),
        # pooler
        "w_pool": nrm(ks[9], (HIDDEN, HIDDEN)), "b_pool": zeros((1, HIDDEN)),
    }


def pack_params(p):
    """Pack all parameters into 2 contiguous lane-dense slabs (2 DMAs)."""
    def pad_cols(m, width=SLAB_W):
        return jnp.pad(m, ((0, 0), (0, width - m.shape[1])))

    # fused embedding table: [word (64) | type (2 -> pad 16) | pos (16)] rows
    emb_tbl = jnp.concatenate([
        p["word_emb"],
        jnp.pad(p["type_emb"], ((0, 16 - NUM_TYPES), (0, 0))),
        p["pos_emb"],
    ], axis=0)                                                 # (96, 32)
    wqkv = jnp.concatenate([p["wq"], p["wk"], p["wv"]], axis=1)  # (32, 96)

    w_slab = jnp.concatenate([
        pad_cols(emb_tbl), pad_cols(wqkv), pad_cols(p["wo"]),
        pad_cols(p["w1"]), pad_cols(p["w2"]), pad_cols(p["w_pool"]),
    ], axis=0).astype(jnp.bfloat16)                            # (288, 128) bf16
    assert w_slab.shape == (W_ROWS, SLAB_W)

    def vrow(v, width=SLAB_W):
        v = v.reshape(1, -1)
        return jnp.pad(v, ((0, 0), (0, width - v.shape[1])))

    bqkv = jnp.concatenate([p["bq"], p["bk"], p["bv"]], axis=-1)  # (1, 96)
    vec_slab = jnp.concatenate([
        vrow(p["lne_g"]), vrow(p["lne_b"]), vrow(bqkv), vrow(p["bo"]),
        vrow(p["ln1_g"]), vrow(p["ln1_b"]), vrow(p["b1"]), vrow(p["b2"]),
        vrow(p["ln2_g"]), vrow(p["ln2_b"]), vrow(p["b_pool"]),
        jnp.zeros((VEC_ROWS - 11, SLAB_W), jnp.float32),
    ], axis=0)                                                 # (16, 128) f32
    assert vec_slab.shape == (VEC_ROWS, SLAB_W)
    return {"w_slab": w_slab, "vec_slab": vec_slab}


# ------------------------------ forward (HFTextModel) --------------------------
def hf_text_model_forward(input_text_batch, packed_params, input_text2_batch=None,
                          padding=True, truncation=True):
    tokenize_res = tokenize(input_text_batch, input_text2_batch,
                            padding=padding, truncation=truncation,
                            max_length=MAX_LEN)
    encode_res = encode(tokenize_res, packed_params)
    return {"tokenize_res": tokenize_res, "encode_res": encode_res}


# ----------------------------------- main -------------------------------------
if __name__ == "__main__":
    key = jax.random.PRNGKey(0)
    params = init_params(key)
    packed = pack_params(params)

    # deterministic example inputs consistent with forward(List[str])
    texts = [
        "the quick brown fox jumps over the lazy dog",
        "pallas kernels keep activations resident in vmem",
    ]

    out = hf_text_model_forward(texts, packed)
    jax.block_until_ready(out)

    tok = out["tokenize_res"]
    enc = out["encode_res"]
    assert tok["input_ids"].shape == (BATCH, MAX_LEN)
    assert tok["attention_mask"].shape == (BATCH, MAX_LEN)
    assert enc["last_hidden_state"].shape == (BATCH, MAX_LEN, HIDDEN)
    assert enc["pooler_output"].shape == (BATCH, HIDDEN)
    assert len(enc["hidden_states"]) == 2
    print("KERNEL_OK")
</pallas_src>

<mosaic_0001>
module attributes {stable_mosaic.version = 11 : i64} {
  func.func @_bert_encoder_kernel(%arg0: i32, %arg1: memref<1x16x2xi32, #tpu.memory_space<vmem>>, %arg2: memref<1x1x16xf32, #tpu.memory_space<vmem>>, %arg3: memref<288x128xbf16, #tpu.memory_space<vmem>>, %arg4: memref<16x128xf32, #tpu.memory_space<vmem>>, %arg5: memref<1x16x128xf32, #tpu.memory_space<vmem>>) attributes {dimension_semantics = [#tpu.dimension_semantics<parallel>], iteration_bounds = array<i64: 2>, scalar_prefetch = 0 : i64, scratch_operands = 0 : i64, tpu.core_type = #tpu.core_type<tc>, window_params = [{transform_indices = @transform_0, window_bounds = array<i64: 1, 16, 2>}, {transform_indices = @transform_1, window_bounds = array<i64: 1, 1, 16>}, {pipeline_mode = #tpu.pipeline_mode<synchronous>, transform_indices = @transform_2, window_bounds = array<i64: 288, 128>}, {pipeline_mode = #tpu.pipeline_mode<synchronous>, transform_indices = @transform_3, window_bounds = array<i64: 16, 128>}, {transform_indices = @transform_4, window_bounds = array<i64: 1, 16, 128>}]} {
    %c0 = arith.constant 0 : index
    %c0_0 = arith.constant 0 : index
    %0 = vector.load %arg4[%c0, %c0_0] : memref<16x128xf32, #tpu.memory_space<vmem>>, vector<16x128xf32>
    %1 = vector.extract_strided_slice %0 {offsets = [0, 0], sizes = [1, 32], strides = [1, 1]} : vector<16x128xf32> to vector<1x32xf32>
    %2 = vector.extract_strided_slice %0 {offsets = [1, 0], sizes = [1, 32], strides = [1, 1]} : vector<16x128xf32> to vector<1x32xf32>
    %3 = vector.extract_strided_slice %0 {offsets = [2, 0], sizes = [1, 96], strides = [1, 1]} : vector<16x128xf32> to vector<1x96xf32>
    %4 = vector.extract_strided_slice %0 {offsets = [3, 0], sizes = [1, 32], strides = [1, 1]} : vector<16x128xf32> to vector<1x32xf32>
    %5 = vector.extract_strided_slice %0 {offsets = [4, 0], sizes = [1, 32], strides = [1, 1]} : vector<16x128xf32> to vector<1x32xf32>
    %6 = vector.extract_strided_slice %0 {offsets = [5, 0], sizes = [1, 32], strides = [1, 1]} : vector<16x128xf32> to vector<1x32xf32>
    %7 = vector.extract_strided_slice %0 {offsets = [6, 0], sizes = [1, 64], strides = [1, 1]} : vector<16x128xf32> to vector<1x64xf32>
    %8 = vector.extract_strided_slice %0 {offsets = [7, 0], sizes = [1, 32], strides = [1, 1]} : vector<16x128xf32> to vector<1x32xf32>
    %9 = vector.extract_strided_slice %0 {offsets = [8, 0], sizes = [1, 32], strides = [1, 1]} : vector<16x128xf32> to vector<1x32xf32>
    %10 = vector.extract_strided_slice %0 {offsets = [9, 0], sizes = [1, 32], strides = [1, 1]} : vector<16x128xf32> to vector<1x32xf32>
    %11 = vector.extract_strided_slice %0 {offsets = [10, 0], sizes = [1, 32], strides = [1, 1]} : vector<16x128xf32> to vector<1x32xf32>
    %c0_1 = arith.constant 0 : index
    %c0_2 = arith.constant 0 : index
    %c0_3 = arith.constant 0 : index
    %12 = vector.load %arg1[%c0_1, %c0_2, %c0_3] : memref<1x16x2xi32, #tpu.memory_space<vmem>>, vector<1x16x2xi32>
    %13 = vector.extract_strided_slice %12 {offsets = [0, 0, 0], sizes = [1, 16, 1], strides = [1, 1, 1]} : vector<1x16x2xi32> to vector<1x16x1xi32>
    %14 = vector.shape_cast %13 : vector<1x16x1xi32> to vector<16x1xi32>
    %15 = vector.extract_strided_slice %12 {offsets = [0, 0, 1], sizes = [1, 16, 1], strides = [1, 1, 1]} : vector<1x16x2xi32> to vector<1x16x1xi32>
    %16 = vector.shape_cast %15 : vector<1x16x1xi32> to vector<16x1xi32>
    %c0_4 = arith.constant 0 : index
    %c0_5 = arith.constant 0 : index
    %c0_6 = arith.constant 0 : index
    %17 = vector.load %arg2[%c0_4, %c0_5, %c0_6] : memref<1x1x16xf32, #tpu.memory_space<vmem>>, vector<1x1x16xf32>
    %18 = vector.shape_cast %17 : vector<1x1x16xf32> to vector<1x16xf32>
    %19 = tpu.iota {dimensions = array<i32: 0>} : vector<16x96xi32>
    %20 = tpu.iota {dimensions = array<i32: 1>} : vector<16x96xi32>
    %21 = vector.broadcast %14 : vector<16x1xi32> to vector<16x96xi32>
    %22 = arith.cmpi eq, %20, %21 : vector<16x96xi32>
    %c64_i32 = arith.constant 64 : i32
    %23 = vector.broadcast %c64_i32 : i32 to vector<16x1xi32>
    %24 = arith.addi %23, %16 : vector<16x1xi32>
    %25 = vector.broadcast %24 : vector<16x1xi32> to vector<16x96xi32>
    %26 = arith.cmpi eq, %20, %25 : vector<16x96xi32>
    %27 = arith.ori %22, %26 : vector<16x96xi1>
    %c80_i32 = arith.constant 80 : i32
    %28 = vector.broadcast %c80_i32 : i32 to vector<16x96xi32>
    %29 = arith.addi %28, %19 : vector<16x96xi32>
    %30 = arith.cmpi eq, %20, %29 : vector<16x96xi32>
    %31 = arith.ori %27, %30 : vector<16x96xi1>
    %32 = arith.extui %31 : vector<16x96xi1> to vector<16x96xi32>
    %33 = arith.sitofp %32 : vector<16x96xi32> to vector<16x96xf32>
    %34 = arith.truncf %33 : vector<16x96xf32> to vector<16x96xbf16>
    %c0_7 = arith.constant 0 : index
    %c0_8 = arith.constant 0 : index
    %35 = vector.load %arg3[%c0_7, %c0_8] : memref<288x128xbf16, #tpu.memory_space<vmem>>, vector<96x32xbf16>
    %cst = arith.constant dense<0.000000e+00> : vector<16x32xf32>
    %36 = tpu.matmul %34, %35, %cst {dimension_numbers = #tpu.dot_dimension_numbers<[1], [0], [0], [1], [0, 0, 1, 1], [], []>} : vector<16x96xbf16>, vector<96x32xbf16>, vector<16x32xf32> -> vector<16x32xf32>
    %cst_9 = arith.constant dense<0.000000e+00> : vector<16xf32>
    %37 = vector.multi_reduction <add>, %36, %cst_9 [1] : vector<16x32xf32> to vector<16xf32>
    %38 = vector.shape_cast %37 : vector<16xf32> to vector<16x1xf32>
    %cst_10 = arith.constant 3.200000e+01 : f32
    %39 = vector.broadcast %cst_10 : f32 to vector<16x1xf32>
    %40 = arith.divf %38, %39 : vector<16x1xf32>
    %41 = vector.broadcast %40 : vector<16x1xf32> to vector<16x32xf32>
    %42 = arith.subf %36, %41 : vector<16x32xf32>
    %43 = arith.mulf %42, %42 : vector<16x32xf32>
    %cst_11 = arith.constant dense<0.000000e+00> : vector<16xf32>
    %44 = vector.multi_reduction <add>, %43, %cst_11 [1] : vector<16x32xf32> to vector<16xf32>
    %45 = vector.shape_cast %44 : vector<16xf32> to vector<16x1xf32>
    %cst_12 = arith.constant 3.200000e+01 : f32
    %46 = vector.broadcast %cst_12 : f32 to vector<16x1xf32>
    %47 = arith.divf %45, %46 : vector<16x1xf32>
    %48 = vector.broadcast %40 : vector<16x1xf32> to vector<16x32xf32>
    %49 = arith.subf %36, %48 : vector<16x32xf32>
    %cst_13 = arith.constant 9.99999996E-13 : f32
    %50 = vector.broadcast %cst_13 : f32 to vector<16x1xf32>
    %51 = arith.addf %47, %50 : vector<16x1xf32>
    %52 = math.rsqrt %51 : vector<16x1xf32>
    %53 = vector.broadcast %52 : vector<16x1xf32> to vector<16x32xf32>
    %54 = arith.mulf %49, %53 : vector<16x32xf32>
    %55 = vector.broadcast %1 : vector<1x32xf32> to vector<16x32xf32>
    %56 = arith.mulf %54, %55 : vector<16x32xf32>
    %57 = vector.broadcast %2 : vector<1x32xf32> to vector<16x32xf32>
    %58 = arith.addf %56, %57 : vector<16x32xf32>
    %59 = arith.truncf %58 : vector<16x32xf32> to vector<16x32xbf16>
    %c96 = arith.constant 96 : index
    %c0_14 = arith.constant 0 : index
    %60 = vector.load %arg3[%c96, %c0_14] : memref<288x128xbf16, #tpu.memory_space<vmem>>, vector<32x96xbf16>
    %cst_15 = arith.constant dense<0.000000e+00> : vector<16x96xf32>
    %61 = tpu.matmul %59, %60, %cst_15 {dimension_numbers = #tpu.dot_dimension_numbers<[1], [0], [0], [1], [0, 0, 1, 1], [], []>} : vector<16x32xbf16>, vector<32x96xbf16>, vector<16x96xf32> -> vector<16x96xf32>
    %62 = vector.broadcast %3 : vector<1x96xf32> to vector<16x96xf32>
    %63 = arith.addf %61, %62 : vector<16x96xf32>
    %64 = vector.extract_strided_slice %63 {offsets = [0, 0], sizes = [16, 16], strides = [1, 1]} : vector<16x96xf32> to vector<16x16xf32>
    %65 = vector.extract_strided_slice %63 {offsets = [0, 32], sizes = [16, 16], strides = [1, 1]} : vector<16x96xf32> to vector<16x16xf32>
    %66 = vector.extract_strided_slice %63 {offsets = [0, 64], sizes = [16, 16], strides = [1, 1]} : vector<16x96xf32> to vector<16x16xf32>
    %67 = arith.truncf %64 : vector<16x16xf32> to vector<16x16xbf16>
    %68 = arith.truncf %65 : vector<16x16xf32> to vector<16x16xbf16>
    %cst_16 = arith.constant dense<0.000000e+00> : vector<16x16xf32>
    %69 = tpu.matmul %67, %68, %cst_16 {dimension_numbers = #tpu.dot_dimension_numbers<[1], [1], [0], [0], [0, 0, 1, 0], [], []>} : vector<16x16xbf16>, vector<16x16xbf16>, vector<16x16xf32> -> vector<16x16xf32>
    %cst_17 = arith.constant 2.500000e-01 : f32
    %70 = vector.broadcast %cst_17 : f32 to vector<16x16xf32>
    %71 = arith.mulf %69, %70 : vector<16x16xf32>
    %72 = vector.broadcast %18 : vector<1x16xf32> to vector<16x16xf32>
    %73 = arith.addf %71, %72 : vector<16x16xf32>
    %cst_18 = arith.constant dense<0xFF800000> : vector<16xf32>
    %74 = vector.multi_reduction <maximumf>, %73, %cst_18 [1] : vector<16x16xf32> to vector<16xf32>
    %75 = vector.shape_cast %74 : vector<16xf32> to vector<16x1xf32>
    %76 = vector.broadcast %75 : vector<16x1xf32> to vector<16x16xf32>
    %77 = arith.subf %73, %76 : vector<16x16xf32>
    %78 = math.exp %77 : vector<16x16xf32>
    %cst_19 = arith.constant dense<0.000000e+00> : vector<16xf32>
    %79 = vector.multi_reduction <add>, %78, %cst_19 [1] : vector<16x16xf32> to vector<16xf32>
    %80 = vector.shape_cast %79 : vector<16xf32> to vector<16x1xf32>
    %81 = tpu.reciprocal %80 {approx = true} : vector<16x1xf32> -> vector<16x1xf32>
    %82 = vector.broadcast %81 : vector<16x1xf32> to vector<16x16xf32>
    %83 = arith.mulf %78, %82 : vector<16x16xf32>
    %84 = arith.truncf %83 : vector<16x16xf32> to vector<16x16xbf16>
    %85 = arith.truncf %66 : vector<16x16xf32> to vector<16x16xbf16>
    %cst_20 = arith.constant dense<0.000000e+00> : vector<16x16xf32>
    %86 = tpu.matmul %84, %85, %cst_20 {dimension_numbers = #tpu.dot_dimension_numbers<[1], [0], [0], [1], [0, 0, 1, 1], [], []>} : vector<16x16xbf16>, vector<16x16xbf16>, vector<16x16xf32> -> vector<16x16xf32>
    %87 = arith.truncf %86 : vector<16x16xf32> to vector<16x16xbf16>
    %c128 = arith.constant 128 : index
    %c0_21 = arith.constant 0 : index
    %88 = vector.load %arg3[%c128, %c0_21] : memref<288x128xbf16, #tpu.memory_space<vmem>>, vector<16x32xbf16>
    %cst_22 = arith.constant dense<0.000000e+00> : vector<16x32xf32>
    %89 = tpu.matmul %87, %88, %cst_22 {dimension_numbers = #tpu.dot_dimension_numbers<[1], [0], [0], [1], [0, 0, 1, 1], [], []>} : vector<16x16xbf16>, vector<16x32xbf16>, vector<16x32xf32> -> vector<16x32xf32>
    %90 = vector.extract_strided_slice %63 {offsets = [0, 16], sizes = [16, 16], strides = [1, 1]} : vector<16x96xf32> to vector<16x16xf32>
    %91 = vector.extract_strided_slice %63 {offsets = [0, 48], sizes = [16, 16], strides = [1, 1]} : vector<16x96xf32> to vector<16x16xf32>
    %92 = vector.extract_strided_slice %63 {offsets = [0, 80], sizes = [16, 16], strides = [1, 1]} : vector<16x96xf32> to vector<16x16xf32>
    %93 = arith.truncf %90 : vector<16x16xf32> to vector<16x16xbf16>
    %94 = arith.truncf %91 : vector<16x16xf32> to vector<16x16xbf16>
    %cst_23 = arith.constant dense<0.000000e+00> : vector<16x16xf32>
    %95 = tpu.matmul %93, %94, %cst_23 {dimension_numbers = #tpu.dot_dimension_numbers<[1], [1], [0], [0], [0, 0, 1, 0], [], []>} : vector<16x16xbf16>, vector<16x16xbf16>, vector<16x16xf32> -> vector<16x16xf32>
    %cst_24 = arith.constant 2.500000e-01 : f32
    %96 = vector.broadcast %cst_24 : f32 to vector<16x16xf32>
    %97 = arith.mulf %95, %96 : vector<16x16xf32>
    %98 = vector.broadcast %18 : vector<1x16xf32> to vector<16x16xf32>
    %99 = arith.addf %97, %98 : vector<16x16xf32>
    %cst_25 = arith.constant dense<0xFF800000> : vector<16xf32>
    %100 = vector.multi_reduction <maximumf>, %99, %cst_25 [1] : vector<16x16xf32> to vector<16xf32>
    %101 = vector.shape_cast %100 : vector<16xf32> to vector<16x1xf32>
    %102 = vector.broadcast %101 : vector<16x1xf32> to vector<16x16xf32>
    %103 = arith.subf %99, %102 : vector<16x16xf32>
    %104 = math.exp %103 : vector<16x16xf32>
    %cst_26 = arith.constant dense<0.000000e+00> : vector<16xf32>
    %105 = vector.multi_reduction <add>, %104, %cst_26 [1] : vector<16x16xf32> to vector<16xf32>
    %106 = vector.shape_cast %105 : vector<16xf32> to vector<16x1xf32>
    %107 = tpu.reciprocal %106 {approx = true} : vector<16x1xf32> -> vector<16x1xf32>
    %108 = vector.broadcast %107 : vector<16x1xf32> to vector<16x16xf32>
    %109 = arith.mulf %104, %108 : vector<16x16xf32>
    %110 = arith.truncf %109 : vector<16x16xf32> to vector<16x16xbf16>
    %111 = arith.truncf %92 : vector<16x16xf32> to vector<16x16xbf16>
    %cst_27 = arith.constant dense<0.000000e+00> : vector<16x16xf32>
    %112 = tpu.matmul %110, %111, %cst_27 {dimension_numbers = #tpu.dot_dimension_numbers<[1], [0], [0], [1], [0, 0, 1, 1], [], []>} : vector<16x16xbf16>, vector<16x16xbf16>, vector<16x16xf32> -> vector<16x16xf32>
    %113 = arith.truncf %112 : vector<16x16xf32> to vector<16x16xbf16>
    %c144 = arith.constant 144 : index
    %c0_28 = arith.constant 0 : index
    %114 = vector.load %arg3[%c144, %c0_28] : memref<288x128xbf16, #tpu.memory_space<vmem>>, vector<16x32xbf16>
    %cst_29 = arith.constant dense<0.000000e+00> : vector<16x32xf32>
    %115 = tpu.matmul %113, %114, %cst_29 {dimension_numbers = #tpu.dot_dimension_numbers<[1], [0], [0], [1], [0, 0, 1, 1], [], []>} : vector<16x16xbf16>, vector<16x32xbf16>, vector<16x32xf32> -> vector<16x32xf32>
    %116 = arith.addf %89, %115 : vector<16x32xf32>
    %117 = vector.broadcast %4 : vector<1x32xf32> to vector<16x32xf32>
    %118 = arith.addf %116, %117 : vector<16x32xf32>
    %119 = arith.addf %58, %118 : vector<16x32xf32>
    %cst_30 = arith.constant dense<0.000000e+00> : vector<16xf32>
    %120 = vector.multi_reduction <add>, %119, %cst_30 [1] : vector<16x32xf32> to vector<16xf32>
    %121 = vector.shape_cast %120 : vector<16xf32> to vector<16x1xf32>
    %cst_31 = arith.constant 3.200000e+01 : f32
    %122 = vector.broadcast %cst_31 : f32 to vector<16x1xf32>
    %123 = arith.divf %121, %122 : vector<16x1xf32>
    %124 = vector.broadcast %123 : vector<16x1xf32> to vector<16x32xf32>
    %125 = arith.subf %119, %124 : vector<16x32xf32>
    %126 = arith.mulf %125, %125 : vector<16x32xf32>
    %cst_32 = arith.constant dense<0.000000e+00> : vector<16xf32>
    %127 = vector.multi_reduction <add>, %126, %cst_32 [1] : vector<16x32xf32> to vector<16xf32>
    %128 = vector.shape_cast %127 : vector<16xf32> to vector<16x1xf32>
    %cst_33 = arith.constant 3.200000e+01 : f32
    %129 = vector.broadcast %cst_33 : f32 to vector<16x1xf32>
    %130 = arith.divf %128, %129 : vector<16x1xf32>
    %131 = vector.broadcast %123 : vector<16x1xf32> to vector<16x32xf32>
    %132 = arith.subf %119, %131 : vector<16x32xf32>
    %cst_34 = arith.constant 9.99999996E-13 : f32
    %133 = vector.broadcast %cst_34 : f32 to vector<16x1xf32>
    %134 = arith.addf %130, %133 : vector<16x1xf32>
    %135 = math.rsqrt %134 : vector<16x1xf32>
    %136 = vector.broadcast %135 : vector<16x1xf32> to vector<16x32xf32>
    %137 = arith.mulf %132, %136 : vector<16x32xf32>
    %138 = vector.broadcast %5 : vector<1x32xf32> to vector<16x32xf32>
    %139 = arith.mulf %137, %138 : vector<16x32xf32>
    %140 = vector.broadcast %6 : vector<1x32xf32> to vector<16x32xf32>
    %141 = arith.addf %139, %140 : vector<16x32xf32>
    %142 = arith.truncf %141 : vector<16x32xf32> to vector<16x32xbf16>
    %c160 = arith.constant 160 : index
    %c0_35 = arith.constant 0 : index
    %143 = vector.load %arg3[%c160, %c0_35] : memref<288x128xbf16, #tpu.memory_space<vmem>>, vector<32x64xbf16>
    %cst_36 = arith.constant dense<0.000000e+00> : vector<16x64xf32>
    %144 = tpu.matmul %142, %143, %cst_36 {dimension_numbers = #tpu.dot_dimension_numbers<[1], [0], [0], [1], [0, 0, 1, 1], [], []>} : vector<16x32xbf16>, vector<32x64xbf16>, vector<16x64xf32> -> vector<16x64xf32>
    %145 = vector.broadcast %7 : vector<1x64xf32> to vector<16x64xf32>
    %146 = arith.addf %144, %145 : vector<16x64xf32>
    %147 = arith.mulf %146, %146 : vector<16x64xf32>
    %148 = arith.mulf %146, %147 : vector<16x64xf32>
    %cst_37 = arith.constant 4.471500e-02 : f32
    %149 = vector.broadcast %cst_37 : f32 to vector<16x64xf32>
    %150 = arith.mulf %149, %148 : vector<16x64xf32>
    %151 = arith.addf %146, %150 : vector<16x64xf32>
    %cst_38 = arith.constant 0.797884583 : f32
    %152 = vector.broadcast %cst_38 : f32 to vector<16x64xf32>
    %153 = arith.mulf %152, %151 : vector<16x64xf32>
    %154 = math.tanh %153 : vector<16x64xf32>
    %cst_39 = arith.constant 1.000000e+00 : f32
    %155 = vector.broadcast %cst_39 : f32 to vector<16x64xf32>
    %156 = arith.addf %155, %154 : vector<16x64xf32>
    %cst_40 = arith.constant 5.000000e-01 : f32
    %157 = vector.broadcast %cst_40 : f32 to vector<16x64xf32>
    %158 = arith.mulf %157, %156 : vector<16x64xf32>
    %159 = arith.mulf %146, %158 : vector<16x64xf32>
    %160 = arith.truncf %159 : vector<16x64xf32> to vector<16x64xbf16>
    %c192 = arith.constant 192 : index
    %c0_41 = arith.constant 0 : index
    %161 = vector.load %arg3[%c192, %c0_41] : memref<288x128xbf16, #tpu.memory_space<vmem>>, vector<64x32xbf16>
    %cst_42 = arith.constant dense<0.000000e+00> : vector<16x32xf32>
    %162 = tpu.matmul %160, %161, %cst_42 {dimension_numbers = #tpu.dot_dimension_numbers<[1], [0], [0], [1], [0, 0, 1, 1], [], []>} : vector<16x64xbf16>, vector<64x32xbf16>, vector<16x32xf32> -> vector<16x32xf32>
    %163 = vector.broadcast %8 : vector<1x32xf32> to vector<16x32xf32>
    %164 = arith.addf %162, %163 : vector<16x32xf32>
    %165 = arith.addf %141, %164 : vector<16x32xf32>
    %cst_43 = arith.constant dense<0.000000e+00> : vector<16xf32>
    %166 = vector.multi_reduction <add>, %165, %cst_43 [1] : vector<16x32xf32> to vector<16xf32>
    %167 = vector.shape_cast %166 : vector<16xf32> to vector<16x1xf32>
    %cst_44 = arith.constant 3.200000e+01 : f32
    %168 = vector.broadcast %cst_44 : f32 to vector<16x1xf32>
    %169 = arith.divf %167, %168 : vector<16x1xf32>
    %170 = vector.broadcast %169 : vector<16x1xf32> to vector<16x32xf32>
    %171 = arith.subf %165, %170 : vector<16x32xf32>
    %172 = arith.mulf %171, %171 : vector<16x32xf32>
    %cst_45 = arith.constant dense<0.000000e+00> : vector<16xf32>
    %173 = vector.multi_reduction <add>, %172, %cst_45 [1] : vector<16x32xf32> to vector<16xf32>
    %174 = vector.shape_cast %173 : vector<16xf32> to vector<16x1xf32>
    %cst_46 = arith.constant 3.200000e+01 : f32
    %175 = vector.broadcast %cst_46 : f32 to vector<16x1xf32>
    %176 = arith.divf %174, %175 : vector<16x1xf32>
    %177 = vector.broadcast %169 : vector<16x1xf32> to vector<16x32xf32>
    %178 = arith.subf %165, %177 : vector<16x32xf32>
    %cst_47 = arith.constant 9.99999996E-13 : f32
    %179 = vector.broadcast %cst_47 : f32 to vector<16x1xf32>
    %180 = arith.addf %176, %179 : vector<16x1xf32>
    %181 = math.rsqrt %180 : vector<16x1xf32>
    %182 = vector.broadcast %181 : vector<16x1xf32> to vector<16x32xf32>
    %183 = arith.mulf %178, %182 : vector<16x32xf32>
    %184 = vector.broadcast %9 : vector<1x32xf32> to vector<16x32xf32>
    %185 = arith.mulf %183, %184 : vector<16x32xf32>
    %186 = vector.broadcast %10 : vector<1x32xf32> to vector<16x32xf32>
    %187 = arith.addf %185, %186 : vector<16x32xf32>
    %188 = arith.truncf %187 : vector<16x32xf32> to vector<16x32xbf16>
    %c256 = arith.constant 256 : index
    %c0_48 = arith.constant 0 : index
    %189 = vector.load %arg3[%c256, %c0_48] : memref<288x128xbf16, #tpu.memory_space<vmem>>, vector<32x32xbf16>
    %cst_49 = arith.constant dense<0.000000e+00> : vector<16x32xf32>
    %190 = tpu.matmul %188, %189, %cst_49 {dimension_numbers = #tpu.dot_dimension_numbers<[1], [0], [0], [1], [0, 0, 1, 1], [], []>} : vector<16x32xbf16>, vector<32x32xbf16>, vector<16x32xf32> -> vector<16x32xf32>
    %191 = vector.broadcast %11 : vector<1x32xf32> to vector<16x32xf32>
    %192 = arith.addf %190, %191 : vector<16x32xf32>
    %193 = math.tanh %192 : vector<16x32xf32>
    %194 = tpu.concatenate %58, %187, %193, %193 in 1 : vector<16x32xf32>, vector<16x32xf32>, vector<16x32xf32>, vector<16x32xf32> -> vector<16x128xf32>
    %c0_50 = arith.constant 0 : index
    %c0_51 = arith.constant 0 : index
    %c0_52 = arith.constant 0 : index
    %195 = vector.load %arg5[%c0_50, %c0_51, %c0_52] : memref<1x16x128xf32, #tpu.memory_space<vmem>>, vector<1x16x128xf32>
    %196 = vector.shape_cast %195 : vector<1x16x128xf32> to vector<16x128xf32>
    %197 = vector.shape_cast %194 : vector<16x128xf32> to vector<1x16x128xf32>
    tpu.vector_store %arg5[%c0_50, %c0_51, %c0_52], %197 {strides = array<i32>} : memref<1x16x128xf32, #tpu.memory_space<vmem>>, vector<1x16x128xf32>,
    return
  }
  func.func @transform_0(%arg0: i32) -> (i32, i32, i32) {
    %c0_i32 = arith.constant 0 : i32
    %c0_i32_0 = arith.constant 0 : i32
    %c0_i32_1 = arith.constant 0 : i32
    return %arg0, %c0_i32, %c0_i32_0 : i32, i32, i32
  }
  func.func @transform_1(%arg0: i32) -> (i32, i32, i32) {
    %c0_i32 = arith.constant 0 : i32
    %c0_i32_0 = arith.constant 0 : i32
    %c0_i32_1 = arith.constant 0 : i32
    return %arg0, %c0_i32, %c0_i32_0 : i32, i32, i32
  }
  func.func @transform_2(%arg0: i32) -> (i32, i32) {
    %c0_i32 = arith.constant 0 : i32
    %c0_i32_0 = arith.constant 0 : i32
    %c0_i32_1 = arith.constant 0 : i32
    return %c0_i32, %c0_i32_0 : i32, i32
  }
  func.func @transform_3(%arg0: i32) -> (i32, i32) {
    %c0_i32 = arith.constant 0 : i32
    %c0_i32_0 = arith.constant 0 : i32
    %c0_i32_1 = arith.constant 0 : i32
    return %c0_i32, %c0_i32_0 : i32, i32
  }
  func.func @transform_4(%arg0: i32) -> (i32, i32, i32) {
    %c0_i32 = arith.constant 0 : i32
    %c0_i32_0 = arith.constant 0 : i32
    %c0_i32_1 = arith.constant 0 : i32
    return %arg0, %c0_i32, %c0_i32_0 : i32, i32, i32
  }
}

</mosaic_0001>

<llo_original>
// kernel: tpu_custom_call.1
$region0: #{tpu_custom_call.1}
  #allocation0 [shape = 'u32[]', space=smem, size = 0x4, offset = 0x4, fixed_abs, tag = 'smem constant byte address 0x4 - core index']
  #allocation1 [shape = 'u32[144,128]{1,0:T(1,128)}', space=vmem, size = 0x12000, scoped, tag = 'internal scratch']
  %s0 = inlined_call_operand.vmem [shape: s32[2,16,2], index: 0, kind: input, shape index: {}]
  %s1 = inlined_call_operand.vmem [shape: f32[2,1,16], index: 1, kind: input, shape index: {}]
  %s2 = inlined_call_operand.hbm [shape: bf16[288,128], index: 2, kind: input, shape index: {}]
  %s3 = inlined_call_operand.vmem [shape: f32[16,128], index: 3, kind: input, shape index: {}]
  %s4 = inlined_call_operand.hbm [shape: f32[2,16,128], index: 4, kind: output, shape index: {}]
  %s5 = sld [smem:[#allocation0]]
  $region53: #{tpu_custom_call.1} parent=0
    _
  %s7 = ssub.s32 1, %s5
  %s8 = scalar_select 0, %s7, %s5
  $region1: #{tpu_custom_call.1} parent=0
    #allocation2 [shape = 'u8[73728]{0}', space=vmem, size = 0x12000, scoped, tag = 'input window, operand 2, single buffered']
    #allocation3 [shape = 's32[2]{0}', space=sflag, size = 0x8, scoped, tag = 'scoped memory for tpu_custom_call.1']
    #allocation4 [shape = 's32[2]{0}', space=sflag, size = 0x8, scoped, tag = 'scoped memory for tpu_custom_call.1']
    #allocation5 [shape = 'u8[16384]{0}', space=vmem, size = 0x4000, scoped, tag = 'output window, operand 0']
    %9 = vsyncpa [#allocation3], 0
    %10 = vsyncpa [#allocation4], 0
    %s11 = scalar_lea.sflag [#allocation4], 1
    %12 = vsyncpa %s11, 0
    loop: start=0, step=1, limit=4
    $region2: #{tpu_custom_call.1} parent=1 // loop_pre_header
      _
    $region3: #{tpu_custom_call.1} parent=1 // loop_header
      %s14 = sphi 0, %s18
      %p15 = scmp.ge.s32.totalorder %s14, 4
      %s24 = sphi 0, %s26
      %s27 = sphi 0, %s24
      %s28 = sphi 0, %s27
      %s44 = sphi 0, %s28
      %s50 = sphi 0, %s52
      %s53 = sphi 0, %s50
      %s54 = sphi 0, %s53
      %s70 = sphi 0, %s54
      %s74 = sphi 0, %s74
      %s76 = sphi 0, %s74
      %s77 = sphi 0, %s76
      %s91 = sphi 0, %s77
      %s95 = sphi 0, %s95
      %s97 = sphi 0, %s95
      %s98 = sphi 0, %s97
      %s112 = sphi 0, %s98
      %s118 = sphi 0, %s120
      %s121 = sphi 0, %s118
      %s122 = sphi 0, %s121
      %s138 = sphi 0, %s122
    $region4: #{tpu_custom_call.1} parent=1 // loop_header_branch
      %17 = sbr.rel (%p15) target = $region8
    $region5: #{tpu_custom_call.1} parent=1 // loop_body
      %s19 = ssub.s32 %s14, 1
      %s20 = ssub.s32 %s14, 2
      %s21 = sadd.s32 %s14, 1
      %s22 = ssub.s32 %s14, %s21
      %p23 = scmp.eq.s32.totalorder %s22, 0
      %s25 = sadd.s32 %s24, 1
      %s26 = scalar_select %p23, %s24, %s25
      %p29 = pneg %p23
      %p30 = scmp.eq.s32.totalorder %s14, 1
      %p31 = por %p29, %p30
      %p32 = scmp.ne.s32.totalorder %s24, %s27
      %p33 = scmp.eq.s32.totalorder %s14, 0
      %p34 = por %p32, %p33
      %p35 = scmp.ne.s32.totalorder %s24, %s27
      %p36 = scmp.eq.s32.totalorder %s19, 1
      %p37 = por %p35, %p36
      %p38 = scmp.ne.s32.totalorder %s27, %s28
      %p39 = scmp.eq.s32.totalorder %s19, 0
      %p40 = por %p38, %p39
      %p41 = scmp.ne.s32.totalorder %s27, %s28
      %p42 = scmp.eq.s32.totalorder %s20, 1
      %p43 = por %p41, %p42
      %p45 = scmp.ne.s32.totalorder %s28, %s44
      %p46 = scmp.eq.s32.totalorder %s20, 0
      %p47 = por %p45, %p46
      %s48 = ssub.s32 %s14, %s21
      %p49 = scmp.eq.s32.totalorder %s48, 0
      %s51 = sadd.s32 %s50, 1
      %s52 = scalar_select %p49, %s50, %s51
      %p55 = pneg %p49
      %p56 = scmp.eq.s32.totalorder %s14, 1
      %p57 = por %p55, %p56
      %p58 = scmp.ne.s32.totalorder %s50, %s53
      %p59 = scmp.eq.s32.totalorder %s14, 0
      %p60 = por %p58, %p59
      %p61 = scmp.ne.s32.totalorder %s50, %s53
      %p62 = scmp.eq.s32.totalorder %s19, 1
      %p63 = por %p61, %p62
      %p64 = scmp.ne.s32.totalorder %s53, %s54
      %p65 = scmp.eq.s32.totalorder %s19, 0
      %p66 = por %p64, %p65
      %p67 = scmp.ne.s32.totalorder %s53, %s54
      %p68 = scmp.eq.s32.totalorder %s20, 1
      %p69 = por %p67, %p68
      %p71 = scmp.ne.s32.totalorder %s54, %s70
      %p72 = scmp.eq.s32.totalorder %s20, 0
      %p73 = por %p71, %p72
      %s75 = sadd.s32 %s74, 1
      %p78 = scmp.eq.s32.totalorder %s14, 1
      %p79 = scmp.ne.s32.totalorder %s74, %s76
      %p80 = scmp.eq.s32.totalorder %s14, 0
      %p81 = por %p79, %p80
      %p82 = scmp.ne.s32.totalorder %s74, %s76
      %p83 = scmp.eq.s32.totalorder %s19, 1
      %p84 = por %p82, %p83
      %p85 = scmp.ne.s32.totalorder %s76, %s77
      %p86 = scmp.eq.s32.totalorder %s19, 0
      %p87 = por %p85, %p86
      %p88 = scmp.ne.s32.totalorder %s76, %s77
      %p89 = scmp.eq.s32.totalorder %s20, 1
      %p90 = por %p88, %p89
      %p92 = scmp.ne.s32.totalorder %s77, %s91
      %p93 = scmp.eq.s32.totalorder %s20, 0
      %p94 = por %p92, %p93
      %s96 = sadd.s32 %s95, 1
      %p99 = scmp.eq.s32.totalorder %s14, 1
      %p100 = scmp.ne.s32.totalorder %s95, %s97
      %p101 = scmp.eq.s32.totalorder %s14, 0
      %p102 = por %p100, %p101
      %p103 = scmp.ne.s32.totalorder %s95, %s97
      %p104 = scmp.eq.s32.totalorder %s19, 1
      %p105 = por %p103, %p104
      %p106 = scmp.ne.s32.totalorder %s97, %s98
      %p107 = scmp.eq.s32.totalorder %s19, 0
      %p108 = por %p106, %p107
      %p109 = scmp.ne.s32.totalorder %s97, %s98
      %p110 = scmp.eq.s32.totalorder %s20, 1
      %p111 = por %p109, %p110
      %p113 = scmp.ne.s32.totalorder %s98, %s112
      %p114 = scmp.eq.s32.totalorder %s20, 0
      %p115 = por %p113, %p114
      %s116 = ssub.s32 %s14, %s21
      %p117 = scmp.eq.s32.totalorder %s116, 0
      %s119 = sadd.s32 %s118, 1
      %s120 = scalar_select %p117, %s118, %s119
      %p123 = pneg %p117
      %p124 = scmp.eq.s32.totalorder %s14, 1
      %p125 = por %p123, %p124
      %p126 = scmp.ne.s32.totalorder %s118, %s121
      %p127 = scmp.eq.s32.totalorder %s14, 0
      %p128 = por %p126, %p127
      %p129 = scmp.ne.s32.totalorder %s118, %s121
      %p130 = scmp.eq.s32.totalorder %s19, 1
      %p131 = por %p129, %p130
      %p132 = scmp.ne.s32.totalorder %s121, %s122
      %p133 = scmp.eq.s32.totalorder %s19, 0
      %p134 = por %p132, %p133
      %p135 = scmp.ne.s32.totalorder %s121, %s122
      %p136 = scmp.eq.s32.totalorder %s20, 1
      %p137 = por %p135, %p136
      %p139 = scmp.ne.s32.totalorder %s122, %s138
      %p140 = scmp.eq.s32.totalorder %s20, 0
      %p141 = por %p139, %p140
      %p142 = scmp.le.s32.totalorder 1, %s14
      %p143 = scmp.lt.s32.totalorder %s14, 3
      %p144 = pnand %p142, %p143
      %p145 = pneg %p144
      // Predicated region
      $region9: #{tpu_custom_call.1} parent=5 // pred_check
        _
      $region10: #{tpu_custom_call.1} parent=5 // pred_check_branch
        %147 = sbr.rel (%p144) target = $region12
      $region11: #{tpu_custom_call.1} parent=5 // pred_region
        %s148 = ssub.s32 %s14, 1
        // Predicated region
        $region13: #{tpu_custom_call.1} parent=11 // pred_check
          %p149 = pneg %p87
        $region14: #{tpu_custom_call.1} parent=11 // pred_check_branch
          %151 = sbr.rel (%p149) target = $region16
        $region15: #{tpu_custom_call.1} parent=11 // pred_region
          %s153 = ssub.s32 2304, 2304
          %154 = vsyncadd [#allocation3], %s153
          %s155 = sshll.u32 [#allocation2], 4
          %s156 = int_to_ptr.vmem [resolvable:$true] %s155
          %161 = dma.hbm_to_vmem [thread:$0]  %s2, 2304, %s156, [#allocation3], 64, 64, 4
        $region16: #{tpu_custom_call.1} parent=11 // pred_fallthru
          _
        // Predicated region
        $region17: #{tpu_custom_call.1} parent=11 // pred_check
          %p162 = pneg %p108
        $region18: #{tpu_custom_call.1} parent=11 // pred_check_branch
          %164 = sbr.rel (%p162) target = $region20
        $region19: #{tpu_custom_call.1} parent=11 // pred_region
          _
        $region20: #{tpu_custom_call.1} parent=11 // pred_fallthru
          _
      $region12: #{tpu_custom_call.1} parent=5 // pred_fallthru
        _
      %p165 = scmp.lt.s32.totalorder %s14, 2
      // Predicated region
      $region21: #{tpu_custom_call.1} parent=5 // pred_check
        %p166 = pneg %p165
      $region22: #{tpu_custom_call.1} parent=5 // pred_check_branch
        %168 = sbr.rel (%p166) target = $region24
      $region23: #{tpu_custom_call.1} parent=5 // pred_region
        // Predicated region
        $region25: #{tpu_custom_call.1} parent=23 // pred_check
          %p169 = pneg %p34
        $region26: #{tpu_custom_call.1} parent=23 // pred_check_branch
          %171 = sbr.rel (%p169) target = $region28
        $region27: #{tpu_custom_call.1} parent=23 // pred_region
          %p172 = scmp.lt.s32.totalorder %s14, 1
          %s173 = scalar_select %p172, %s14, 1
          %s174 = smul.addr %s173, 2
          %s175 = smul.addr %s174, 8
          %s176 = scalar_lea.vmem %s0, %s175
        $region28: #{tpu_custom_call.1} parent=23 // pred_fallthru
          _
        // Predicated region
        $region29: #{tpu_custom_call.1} parent=23 // pred_check
          %p177 = pneg %p60
        $region30: #{tpu_custom_call.1} parent=23 // pred_check_branch
          %179 = sbr.rel (%p177) target = $region32
        $region31: #{tpu_custom_call.1} parent=23 // pred_region
          %p180 = scmp.lt.s32.totalorder %s14, 1
          %s181 = scalar_select %p180, %s14, 1
          %s182 = scalar_lea.vmem %s1, %s181
        $region32: #{tpu_custom_call.1} parent=23 // pred_fallthru
          _
      $region24: #{tpu_custom_call.1} parent=5 // pred_fallthru
        _
      %p183 = scmp.le.s32.totalorder 1, %s14
      %p184 = scmp.lt.s32.totalorder %s14, 3
      %p185 = pnand %p183, %p184
      %p186 = pneg %p185
      // Predicated region
      $region33: #{tpu_custom_call.1} parent=5 // pred_check
        _
      $region34: #{tpu_custom_call.1} parent=5 // pred_check_branch
        %188 = sbr.rel (%p185) target = $region36
      $region35: #{tpu_custom_call.1} parent=5 // pred_region
        %s189 = ssub.s32 %s14, 1
        // Predicated region
        $region37: #{tpu_custom_call.1} parent=35 // pred_check
          %p190 = pneg %p87
        $region38: #{tpu_custom_call.1} parent=35 // pred_check_branch
          %192 = sbr.rel (%p190) target = $region40
        $region39: #{tpu_custom_call.1} parent=35 // pred_region
          %193 = dma.done [#allocation3], 2304
        $region40: #{tpu_custom_call.1} parent=35 // pred_fallthru
          _
        %p194 = scmp.lt.s32.totalorder %s19, 1
        %s195 = scalar_select %p194, %s19, 1
        %s196 = smul.addr %s195, 2
        %s197 = smul.addr %s196, 8
        %s198 = scalar_lea.vmem %s0, %s197
        %p199 = pneg %p40
        %p200 = pneg %p37
        %p201 = scmp.lt.s32.totalorder %s19, 1
        %s202 = scalar_select %p201, %s19, 1
        %s203 = scalar_lea.vmem %s1, %s202
        %p204 = pneg %p66
        %p205 = pneg %p63
        %p206 = pneg %p87
        %p207 = pneg %p84
        %p208 = pneg %p108
        %p209 = pneg %p105
        %p210 = pneg %p134
        %p211 = pneg %p131
        %s212 = sand.u32 %s121, 1
        %s213 = scalar_lea.sflag [#allocation4], %s212
        %s214 = sand.u32 %s121, 1
        %s215 = smul.addr %s214, 16
        %s216 = scalar_lea.vmem [#allocation5], %s215
        %p217 = scmp.lt.s32.totalorder %s19, 1
        %s218 = scalar_select %p217, %s19, 1
        %s219 = smul.addr %s218, 2
        %s220 = smul.addr %s219, 8
        %s221 = scalar_lea.vmem %s0, %s220
        %p222 = scmp.lt.s32.totalorder %s19, 1
        %s223 = scalar_select %p222, %s19, 1
        %s224 = scalar_lea.vmem %s1, %s223
        %v226 = vld [vmem:[%s3] sm:$0xff]
        %v227 = vld [vmem:[%s3 + $0x8] sm:$0xff]
        %v228 = vld [vmem:[%s221] sm:$0xff]
        %v229 = vld [vmem:[%s221 + $0x8] sm:$0xff]
        %v230 = vld [vmem:[%s224] sm:$0x1]
        %v231 = vlaneseq
        %v232 = vshrl.u32 %v231, 7
        %v233 = vadd.s32 %v232, 8
        %v234 = vlaneseq
        %v235 = vand.u32 %v234, 127
        %236 = vset.pattern.permute.xlu0 0
        %237 = vperm.xlu0 %236, %v228
        %v238 = vpop.permute.xlu0 %237
        %239 = vset.pattern.permute.xlu0 0
        %240 = vperm.xlu0 %239, %v229
        %v241 = vpop.permute.xlu0 %240
        %vm242 = vcmp.eq.s32.totalorder %v235, %v238
        %vm243 = vcmp.eq.s32.totalorder %v235, %v241
        %v244 = vadd.s32 %v228, 64
        %v245 = vadd.s32 %v229, 64
        %246 = vset.pattern.permute.xlu0 1
        %247 = vperm.xlu0 %246, %v244
        %v248 = vpop.permute.xlu0 %247
        %249 = vset.pattern.permute.xlu0 1
        %250 = vperm.xlu0 %249, %v245
        %v251 = vpop.permute.xlu0 %250
        %vm252 = vcmp.eq.s32.totalorder %v235, %v248
        %vm253 = vcmp.eq.s32.totalorder %v235, %v251
        %vm254 = vmor %vm242, %vm252
        %vm255 = vmor %vm243, %vm253
        %v256 = vadd.s32 %v232, 80
        %v257 = vadd.s32 %v233, 80
        %vm258 = vcmp.eq.s32.totalorder %v235, %v256
        %vm259 = vcmp.eq.s32.totalorder %v235, %v257
        %vm260 = vmor %vm254, %vm258
        %vm261 = vmor %vm255, %vm259
        %v262 = vsel %vm260, 1, 0
        %v263 = vsel %vm261, 1, 0
        %v264 = vcvt.s32.f32 %v262
        %v265 = vcvt.s32.f32 %v263
        %v266 = vpack.c.bf16 %v265, %v264
        %v267 = vld [vmem:[#allocation2] sm:$0xf]
        %v268 = vld [vmem:[#allocation2 + $0x4] sm:$0xf]
        %v269 = vld [vmem:[#allocation2 + $0x8] sm:$0xf]
        %v270 = vld [vmem:[#allocation2 + $0xc] sm:$0xf]
        %v271 = vld [vmem:[#allocation2 + $0x10] sm:$0xf]
        %v272 = vld [vmem:[#allocation2 + $0x14] sm:$0xf]
        %v273 = vld [vmem:[#allocation2 + $0x18] sm:$0xf]
        %v274 = vld [vmem:[#allocation2 + $0x1c] sm:$0xf]
        %v275 = vld [vmem:[#allocation2 + $0x20] sm:$0xf]
        %v276 = vld [vmem:[#allocation2 + $0x24] sm:$0xf]
        %v277 = vld [vmem:[#allocation2 + $0x28] sm:$0xf]
        %v278 = vld [vmem:[#allocation2 + $0x2c] sm:$0xf]
        %v291 = vunpack.c.l.b16 %v267
        %v292 = vunpack.c.l.b16 %v268
        %v293 = vunpack.c.l.b16 %v269
        %v294 = vunpack.c.l.b16 %v270
        %v295 = vunpack.c.l.b16 %v271
        %v296 = vunpack.c.l.b16 %v272
        %v297 = vunpack.c.l.b16 %v273
        %v298 = vunpack.c.l.b16 %v274
        %v299 = vunpack.c.l.b16 %v275
        %v300 = vunpack.c.l.b16 %v276
        %v301 = vunpack.c.l.b16 %v277
        %v302 = vunpack.c.l.b16 %v278
        %v303 = vpack.c.b16 %v292, %v291
        %v304 = vpack.c.b16 %v294, %v293
        %v305 = vpack.c.b16 %v296, %v295
        %v306 = vpack.c.b16 %v298, %v297
        %v307 = vpack.c.b16 %v300, %v299
        %v308 = vpack.c.b16 %v302, %v301
        %vm315 = vcmask 785408
        %v317 = vsel %vm315, %v266, 0
        %319 = vmatprep.subr.bf16.mxu0 0
        %320 = vmatpush1.bf16.msra.mxu0 %v303
        %321 = vmatprep.subr.bf16.mxu0 0
        %322 = vmatpush1.bf16.msra.mxu0 %v304
        %323 = vmatprep.subr.bf16.mxu0 0
        %324 = vmatpush1.bf16.msra.mxu0 %v305
        %325 = vmatprep.subr.bf16.mxu0 0
        %326 = vmatpush1.bf16.msra.mxu0 %v306
        %327 = vmatprep.subr.bf16.mxu0 0
        %328 = vmatpush1.bf16.msra.mxu0 %v307
        %329 = vmatprep.subr.bf16.mxu0 0
        %330 = vmatpush1.bf16.msra.mxu0 %v308
        %331 = vmatprep.subr.bf16.mxu0 0
        %332 = vmatpush1.bf16.msra.mxu0 0
        %333 = vmatprep.subr.bf16.mxu0 0
        %334 = vmatpush1.bf16.msra.mxu0 0
        %335 = vmatprep.subr.bf16.mxu0 0
        %336 = vmatpush1.bf16.msra.mxu0 0
        %337 = vmatprep.subr.bf16.mxu0 0
        %338 = vmatpush1.bf16.msra.mxu0 0
        %339 = vmatprep.subr.bf16.mxu0 0
        %340 = vmatpush1.bf16.msra.mxu0 0
        %341 = vmatprep.subr.bf16.mxu0 0
        %342 = vmatpush1.bf16.msra.mxu0 0
        %343 = vmatprep.subr.bf16.mxu0 0
        %344 = vmatpush1.bf16.msra.mxu0 0
        %345 = vmatprep.subr.bf16.mxu0 0
        %346 = vmatpush1.bf16.msra.mxu0 0
        %347 = vmatprep.subr.bf16.mxu0 0
        %348 = vmatpush1.bf16.msra.mxu0 0
        %349 = vmatprep.subr.bf16.mxu0 0
        %350 = vmatpush1.bf16.msra.mxu0 0
        %351 = vmatprep.mubr.bf16.mxu0 0
        %352 = vmatmul.mubr.bf16.gmra.mrb[0].mxu0 %v317
        %v353 = vpop.f32.mrb[0].mxu0
        %v354 = vadd.f32 0.0, %v353
        %v355 = vpop.f32.mrb[0].mxu0
        %v356 = vpop.f32.mrb[0].mxu0
        %v357 = vadd.f32 0.0, %v356
        %v358 = vpop.f32.mrb[0].mxu0
        %359 = vdwg.mxu0
        %vm360 = vcmask 261120
        %v361 = vsel %vm360, %v354, 0.0
        %362 = vadd.xlane.f32.xlu0 %v361
        %v363 = vpop.xlane.xlu0 %362
        %v364 = vsel %vm360, %v357, 0.0
        %365 = vadd.xlane.f32.xlu0 %v364
        %v366 = vpop.xlane.xlu0 %365
        %v367 = vrcp.pop 32.0
        %v368 = vmul.f32 %v363, %v367
        %v369 = vmul.f32 %v366, %v367
        %v370 = vsub.f32 %v354, %v368
        %v371 = vsub.f32 %v357, %v369
        %v372 = vmul.f32 %v370, %v370
        %v373 = vmul.f32 %v371, %v371
        %v374 = vsel %vm360, %v372, 0.0
        %375 = vadd.xlane.f32.xlu0 %v374
        %v376 = vpop.xlane.xlu0 %375
        %v377 = vsel %vm360, %v373, 0.0
        %378 = vadd.xlane.f32.xlu0 %v377
        %v379 = vpop.xlane.xlu0 %378
        %v380 = vmul.f32 %v376, %v367
        %v381 = vmul.f32 %v379, %v367
        %v382 = vadd.f32 %v380, 1e-12
        %v383 = vadd.f32 %v381, 1e-12
        %v384 = vrsqrt.pop %v382
        %v385 = vrsqrt.pop %v383
        %v386 = vmul.f32 %v370, %v384
        %v387 = vmul.f32 %v371, %v385
        %v388 = vlaneseq
        %v389 = vshrl.u32 %v388, 7
        %v390 = vsub.s32 0, %v389
        %v391 = vrot.slane %v226, %v390
        %v392 = vmul.f32 %v386, %v391
        %v393 = vmul.f32 %v387, %v391
        %v394 = vlaneseq
        %v395 = vshrl.u32 %v394, 7
        %v396 = vsub.s32 1, %v395
        %v397 = vrot.slane %v226, %v396
        %v398 = vadd.f32 %v392, %v397
        %v399 = vadd.f32 %v393, %v397
        %v400 = vpack.c.bf16 %v399, %v398
        %v401 = vld [vmem:[#allocation2 + $0x30] sm:$0xf]
        %v402 = vld [vmem:[#allocation2 + $0x34] sm:$0xf]
        %v403 = vld [vmem:[#allocation2 + $0x38] sm:$0xf]
        %v404 = vld [vmem:[#allocation2 + $0x3c] sm:$0xf]
        %v405 = vlaneseq
        %v406 = vshrl.u32 %v405, 7
        %v407 = vsub.s32 2, %v406
        %v408 = vrot.slane %v226, %v407
        %v413 = vunpack.c.l.b16 %v401
        %v414 = vunpack.c.l.b16 %v402
        %v415 = vunpack.c.l.b16 %v403
        %v416 = vunpack.c.l.b16 %v404
        %v417 = vpack.c.b16 %v414, %v413
        %v418 = vpack.c.b16 %v416, %v415
        %v422 = vsel %vm360, %v400, 0
        %424 = vmatprep.subr.bf16.mxu0 0
        %425 = vmatpush1.bf16.msra.mxu0 %v417
        %426 = vmatprep.subr.bf16.mxu0 0
        %427 = vmatpush1.bf16.msra.mxu0 %v418
        %428 = vmatprep.subr.bf16.mxu0 0
        %429 = vmatpush1.bf16.msra.mxu0 0
        %430 = vmatprep.subr.bf16.mxu0 0
        %431 = vmatpush1.bf16.msra.mxu0 0
        %432 = vmatprep.subr.bf16.mxu0 0
        %433 = vmatpush1.bf16.msra.mxu0 0
        %434 = vmatprep.subr.bf16.mxu0 0
        %435 = vmatpush1.bf16.msra.mxu0 0
        %436 = vmatprep.subr.bf16.mxu0 0
        %437 = vmatpush1.bf16.msra.mxu0 0
        %438 = vmatprep.subr.bf16.mxu0 0
        %439 = vmatpush1.bf16.msra.mxu0 0
        %440 = vmatprep.subr.bf16.mxu0 0
        %441 = vmatpush1.bf16.msra.mxu0 0
        %442 = vmatprep.subr.bf16.mxu0 0
        %443 = vmatpush1.bf16.msra.mxu0 0
        %444 = vmatprep.subr.bf16.mxu0 0
        %445 = vmatpush1.bf16.msra.mxu0 0
        %446 = vmatprep.subr.bf16.mxu0 0
        %447 = vmatpush1.bf16.msra.mxu0 0
        %448 = vmatprep.subr.bf16.mxu0 0
        %449 = vmatpush1.bf16.msra.mxu0 0
        %450 = vmatprep.subr.bf16.mxu0 0
        %451 = vmatpush1.bf16.msra.mxu0 0
        %452 = vmatprep.subr.bf16.mxu0 0
        %453 = vmatpush1.bf16.msra.mxu0 0
        %454 = vmatprep.subr.bf16.mxu0 0
        %455 = vmatpush1.bf16.msra.mxu0 0
        %456 = vmatprep.mubr.bf16.mxu0 0
        %457 = vmatmul.mubr.bf16.gmra.mrb[0].mxu0 %v422
        %v458 = vpop.f32.mrb[0].mxu0
        %v459 = vadd.f32 %v408, %v458
        %v460 = vpop.f32.mrb[0].mxu0
        %v461 = vpop.f32.mrb[0].mxu0
        %v462 = vadd.f32 %v408, %v461
        %v463 = vpop.f32.mrb[0].mxu0
        %464 = vdwg.mxu0
        %v465 = vpack.c.bf16 %v462, %v459
        %467 = vrot.lane.b32.xlu0 %v465, 96
        %v468 = vpop.permute.xlu0 %467
        %vm469 = vcmask 130048
        %v471 = vsel %vm469, %v465, 0
        %v474 = vsel %vm469, %v468, 0
        %476 = vmatprep.subr.bf16.mxu0 0
        %477 = vmatpush1.bf16.xpose.msra.mxu0 %v474
        %478 = vmatprep.subr.bf16.mxu0 0
        %479 = vmatpush1.bf16.xpose.msra.mxu0 0
        %480 = vmatprep.subr.bf16.mxu0 0
        %481 = vmatpush1.bf16.xpose.msra.mxu0 0
        %482 = vmatprep.subr.bf16.mxu0 0
        %483 = vmatpush1.bf16.xpose.msra.mxu0 0
        %484 = vmatprep.subr.bf16.mxu0 0
        %485 = vmatpush1.bf16.xpose.msra.mxu0 0
        %486 = vmatprep.subr.bf16.mxu0 0
        %487 = vmatpush1.bf16.xpose.msra.mxu0 0
        %488 = vmatprep.subr.bf16.mxu0 0
        %489 = vmatpush1.bf16.xpose.msra.mxu0 0
        %490 = vmatprep.subr.bf16.mxu0 0
        %491 = vmatpush1.bf16.xpose.msra.mxu0 0
        %492 = vmatprep.subr.bf16.mxu0 0
        %493 = vmatpush1.bf16.xpose.msra.mxu0 0
        %494 = vmatprep.subr.bf16.mxu0 0
        %495 = vmatpush1.bf16.xpose.msra.mxu0 0
        %496 = vmatprep.subr.bf16.mxu0 0
        %497 = vmatpush1.bf16.xpose.msra.mxu0 0
        %498 = vmatprep.subr.bf16.mxu0 0
        %499 = vmatpush1.bf16.xpose.msra.mxu0 0
        %500 = vmatprep.subr.bf16.mxu0 0
        %501 = vmatpush1.bf16.xpose.msra.mxu0 0
        %502 = vmatprep.subr.bf16.mxu0 0
        %503 = vmatpush1.bf16.xpose.msra.mxu0 0
        %504 = vmatprep.subr.bf16.mxu0 0
        %505 = vmatpush1.bf16.xpose.msra.mxu0 0
        %506 = vmatprep.subr.bf16.mxu0 0
        %507 = vmatpush1.bf16.xpose.msra.mxu0 0
        %508 = vmatprep.mubr.bf16.mxu0 0
        %509 = vmatmul.mubr.bf16.gmra.mrb[0].mxu0 %v471
        %v510 = vpop.f32.mrb[0].mxu0
        %v511 = vadd.f32 0.0, %v510
        %v512 = vpop.f32.mrb[0].mxu0
        %v513 = vpop.f32.mrb[0].mxu0
        %v514 = vadd.f32 0.0, %v513
        %v515 = vpop.f32.mrb[0].mxu0
        %516 = vdwg.mxu0
        %v517 = vmul.f32 %v511, 0.25
        %v518 = vmul.f32 %v514, 0.25
        %v520 = vlaneseq
        %v521 = vshrl.u32 %v520, 7
        %v522 = vsub.s32 0, %v521
        %v523 = vrot.slane %v230, %v522
        %v525 = vadd.f32 %v517, %v523
        %v526 = vadd.f32 %v518, %v523
        %v527 = vsel %vm469, %v525, -inf
        %528 = vmax.xlane.f32.xlu0 %v527
        %v529 = vpop.xlane.xlu0 %528
        %v530 = vsel %vm469, %v526, -inf
        %531 = vmax.xlane.f32.xlu0 %v530
        %v532 = vpop.xlane.xlu0 %531
        %v533 = vsub.f32 %v525, %v529
        %v534 = vsub.f32 %v526, %v532
        %v535 = vmul.f32 %v533, 1.442695
        %v536 = vpow.pop %v535
        %v537 = vmul.f32 %v534, 1.442695
        %v538 = vpow.pop %v537
        %v539 = vsel %vm469, %v536, 0.0
        %540 = vadd.xlane.f32.xlu0 %v539
        %v541 = vpop.xlane.xlu0 %540
        %v542 = vsel %vm469, %v538, 0.0
        %543 = vadd.xlane.f32.xlu0 %v542
        %v544 = vpop.xlane.xlu0 %543
        %v545 = vrcp.pop %v541
        %v546 = vrcp.pop %v544
        %v547 = vmul.f32 %v536, %v545
        %v548 = vmul.f32 %v538, %v546
        %v549 = vpack.c.bf16 %v548, %v547
        %550 = vrot.lane.b32.xlu0 %v465, 64
        %v551 = vpop.permute.xlu0 %550
        %v554 = vsel %vm469, %v549, 0
        %556 = vmatprep.subr.bf16.mxu0 0
        %557 = vmatpush1.bf16.msra.mxu0 %v551
        %558 = vmatprep.subr.bf16.mxu0 0
        %559 = vmatpush1.bf16.msra.mxu0 0
        %560 = vmatprep.subr.bf16.mxu0 0
        %561 = vmatpush1.bf16.msra.mxu0 0
        %562 = vmatprep.subr.bf16.mxu0 0
        %563 = vmatpush1.bf16.msra.mxu0 0
        %564 = vmatprep.subr.bf16.mxu0 0
        %565 = vmatpush1.bf16.msra.mxu0 0
        %566 = vmatprep.subr.bf16.mxu0 0
        %567 = vmatpush1.bf16.msra.mxu0 0
        %568 = vmatprep.subr.bf16.mxu0 0
        %569 = vmatpush1.bf16.msra.mxu0 0
        %570 = vmatprep.subr.bf16.mxu0 0
        %571 = vmatpush1.bf16.msra.mxu0 0
        %572 = vmatprep.subr.bf16.mxu0 0
        %573 = vmatpush1.bf16.msra.mxu0 0
        %574 = vmatprep.subr.bf16.mxu0 0
        %575 = vmatpush1.bf16.msra.mxu0 0
        %576 = vmatprep.subr.bf16.mxu0 0
        %577 = vmatpush1.bf16.msra.mxu0 0
        %578 = vmatprep.subr.bf16.mxu0 0
        %579 = vmatpush1.bf16.msra.mxu0 0
        %580 = vmatprep.subr.bf16.mxu0 0
        %581 = vmatpush1.bf16.msra.mxu0 0
        %582 = vmatprep.subr.bf16.mxu0 0
        %583 = vmatpush1.bf16.msra.mxu0 0
        %584 = vmatprep.subr.bf16.mxu0 0
        %585 = vmatpush1.bf16.msra.mxu0 0
        %586 = vmatprep.subr.bf16.mxu0 0
        %587 = vmatpush1.bf16.msra.mxu0 0
        %588 = vmatprep.mubr.bf16.mxu0 0
        %589 = vmatmul.mubr.bf16.gmra.mrb[0].mxu0 %v554
        %v590 = vpop.f32.mrb[0].mxu0
        %v591 = vadd.f32 0.0, %v590
        %v592 = vpop.f32.mrb[0].mxu0
        %v593 = vpop.f32.mrb[0].mxu0
        %v594 = vadd.f32 0.0, %v593
        %v595 = vpop.f32.mrb[0].mxu0
        %596 = vdwg.mxu0
        %v597 = vpack.c.bf16 %v594, %v591
        %v598 = vld [vmem:[#allocation2 + $0x40] sm:$0xf]
        %v599 = vld [vmem:[#allocation2 + $0x44] sm:$0xf]
        %600 = vrot.lane.b32.xlu0 %v465, 112
        %v601 = vpop.permute.xlu0 %600
        %602 = vrot.lane.b32.xlu0 %v465, 80
        %v603 = vpop.permute.xlu0 %602
        %v605 = vsel %vm469, %v601, 0
        %v608 = vsel %vm469, %v603, 0
        %610 = vmatprep.subr.bf16.mxu0 0
        %611 = vmatpush1.bf16.xpose.msra.mxu0 %v608
        %612 = vmatprep.subr.bf16.mxu0 0
        %613 = vmatpush1.bf16.xpose.msra.mxu0 0
        %614 = vmatprep.subr.bf16.mxu0 0
        %615 = vmatpush1.bf16.xpose.msra.mxu0 0
        %616 = vmatprep.subr.bf16.mxu0 0
        %617 = vmatpush1.bf16.xpose.msra.mxu0 0
        %618 = vmatprep.subr.bf16.mxu0 0
        %619 = vmatpush1.bf16.xpose.msra.mxu0 0
        %620 = vmatprep.subr.bf16.mxu0 0
        %621 = vmatpush1.bf16.xpose.msra.mxu0 0
        %622 = vmatprep.subr.bf16.mxu0 0
        %623 = vmatpush1.bf16.xpose.msra.mxu0 0
        %624 = vmatprep.subr.bf16.mxu0 0
        %625 = vmatpush1.bf16.xpose.msra.mxu0 0
        %626 = vmatprep.subr.bf16.mxu0 0
        %627 = vmatpush1.bf16.xpose.msra.mxu0 0
        %628 = vmatprep.subr.bf16.mxu0 0
        %629 = vmatpush1.bf16.xpose.msra.mxu0 0
        %630 = vmatprep.subr.bf16.mxu0 0
        %631 = vmatpush1.bf16.xpose.msra.mxu0 0
        %632 = vmatprep.subr.bf16.mxu0 0
        %633 = vmatpush1.bf16.xpose.msra.mxu0 0
        %634 = vmatprep.subr.bf16.mxu0 0
        %635 = vmatpush1.bf16.xpose.msra.mxu0 0
        %636 = vmatprep.subr.bf16.mxu0 0
        %637 = vmatpush1.bf16.xpose.msra.mxu0 0
        %638 = vmatprep.subr.bf16.mxu0 0
        %639 = vmatpush1.bf16.xpose.msra.mxu0 0
        %640 = vmatprep.subr.bf16.mxu0 0
        %641 = vmatpush1.bf16.xpose.msra.mxu0 0
        %642 = vmatprep.mubr.bf16.mxu0 0
        %643 = vmatmul.mubr.bf16.gmra.mrb[0].mxu0 %v605
        %v644 = vpop.f32.mrb[0].mxu0
        %v645 = vadd.f32 0.0, %v644
        %v646 = vpop.f32.mrb[0].mxu0
        %v647 = vpop.f32.mrb[0].mxu0
        %v648 = vadd.f32 0.0, %v647
        %v649 = vpop.f32.mrb[0].mxu0
        %650 = vdwg.mxu0
        %v651 = vmul.f32 %v645, 0.25
        %v652 = vmul.f32 %v648, 0.25
        %v653 = vadd.f32 %v651, %v523
        %v654 = vadd.f32 %v652, %v523
        %v655 = vsel %vm469, %v653, -inf
        %656 = vmax.xlane.f32.xlu0 %v655
        %v657 = vpop.xlane.xlu0 %656
        %v658 = vsel %vm469, %v654, -inf
        %659 = vmax.xlane.f32.xlu0 %v658
        %v660 = vpop.xlane.xlu0 %659
        %v661 = vsub.f32 %v653, %v657
        %v662 = vsub.f32 %v654, %v660
        %v663 = vmul.f32 %v661, 1.442695
        %v664 = vpow.pop %v663
        %v665 = vmul.f32 %v662, 1.442695
        %v666 = vpow.pop %v665
        %v667 = vsel %vm469, %v664, 0.0
        %668 = vadd.xlane.f32.xlu0 %v667
        %v669 = vpop.xlane.xlu0 %668
        %v670 = vsel %vm469, %v666, 0.0
        %671 = vadd.xlane.f32.xlu0 %v670
        %v672 = vpop.xlane.xlu0 %671
        %v673 = vrcp.pop %v669
        %v674 = vrcp.pop %v672
        %v675 = vmul.f32 %v664, %v673
        %v676 = vmul.f32 %v666, %v674
        %v677 = vpack.c.bf16 %v676, %v675
        %678 = vrot.lane.b32.xlu0 %v465, 48
        %v679 = vpop.permute.xlu0 %678
        %v682 = vsel %vm469, %v677, 0
        %684 = vmatprep.subr.bf16.mxu0 0
        %685 = vmatpush1.bf16.msra.mxu0 %v679
        %686 = vmatprep.subr.bf16.mxu0 0
        %687 = vmatpush1.bf16.msra.mxu0 0
        %688 = vmatprep.subr.bf16.mxu0 0
        %689 = vmatpush1.bf16.msra.mxu0 0
        %690 = vmatprep.subr.bf16.mxu0 0
        %691 = vmatpush1.bf16.msra.mxu0 0
        %692 = vmatprep.subr.bf16.mxu0 0
        %693 = vmatpush1.bf16.msra.mxu0 0
        %694 = vmatprep.subr.bf16.mxu0 0
        %695 = vmatpush1.bf16.msra.mxu0 0
        %696 = vmatprep.subr.bf16.mxu0 0
        %697 = vmatpush1.bf16.msra.mxu0 0
        %698 = vmatprep.subr.bf16.mxu0 0
        %699 = vmatpush1.bf16.msra.mxu0 0
        %700 = vmatprep.subr.bf16.mxu0 0
        %701 = vmatpush1.bf16.msra.mxu0 0
        %702 = vmatprep.subr.bf16.mxu0 0
        %703 = vmatpush1.bf16.msra.mxu0 0
        %704 = vmatprep.subr.bf16.mxu0 0
        %705 = vmatpush1.bf16.msra.mxu0 0
        %706 = vmatprep.subr.bf16.mxu0 0
        %707 = vmatpush1.bf16.msra.mxu0 0
        %708 = vmatprep.subr.bf16.mxu0 0
        %709 = vmatpush1.bf16.msra.mxu0 0
        %710 = vmatprep.subr.bf16.mxu0 0
        %711 = vmatpush1.bf16.msra.mxu0 0
        %712 = vmatprep.subr.bf16.mxu0 0
        %713 = vmatpush1.bf16.msra.mxu0 0
        %714 = vmatprep.subr.bf16.mxu0 0
        %715 = vmatpush1.bf16.msra.mxu0 0
        %716 = vmatprep.mubr.bf16.mxu0 0
        %717 = vmatmul.mubr.bf16.gmra.mrb[0].mxu0 %v682
        %v718 = vpop.f32.mrb[0].mxu0
        %v719 = vadd.f32 0.0, %v718
        %v720 = vpop.f32.mrb[0].mxu0
        %v721 = vpop.f32.mrb[0].mxu0
        %v722 = vadd.f32 0.0, %v721
        %v723 = vpop.f32.mrb[0].mxu0
        %724 = vdwg.mxu0
        %v725 = vpack.c.bf16 %v722, %v719
        %v726 = vld [vmem:[#allocation2 + $0x48] sm:$0xf]
        %v727 = vld [vmem:[#allocation2 + $0x4c] sm:$0xf]
        %v730 = vunpack.c.l.b16 %v726
        %v731 = vunpack.c.l.b16 %v727
        %v732 = vpack.c.b16 %v731, %v730
        %v735 = vsel %vm469, %v725, 0
        %737 = vmatprep.subr.bf16.mxu0 0
        %738 = vmatpush1.bf16.msra.mxu0 %v732
        %739 = vmatprep.subr.bf16.mxu0 0
        %740 = vmatpush1.bf16.msra.mxu0 0
        %741 = vmatprep.subr.bf16.mxu0 0
        %742 = vmatpush1.bf16.msra.mxu0 0
        %743 = vmatprep.subr.bf16.mxu0 0
        %744 = vmatpush1.bf16.msra.mxu0 0
        %745 = vmatprep.subr.bf16.mxu0 0
        %746 = vmatpush1.bf16.msra.mxu0 0
        %747 = vmatprep.subr.bf16.mxu0 0
        %748 = vmatpush1.bf16.msra.mxu0 0
        %749 = vmatprep.subr.bf16.mxu0 0
        %750 = vmatpush1.bf16.msra.mxu0 0
        %751 = vmatprep.subr.bf16.mxu0 0
        %752 = vmatpush1.bf16.msra.mxu0 0
        %753 = vmatprep.subr.bf16.mxu0 0
        %754 = vmatpush1.bf16.msra.mxu0 0
        %755 = vmatprep.subr.bf16.mxu0 0
        %756 = vmatpush1.bf16.msra.mxu0 0
        %757 = vmatprep.subr.bf16.mxu0 0
        %758 = vmatpush1.bf16.msra.mxu0 0
        %759 = vmatprep.subr.bf16.mxu0 0
        %760 = vmatpush1.bf16.msra.mxu0 0
        %761 = vmatprep.subr.bf16.mxu0 0
        %762 = vmatpush1.bf16.msra.mxu0 0
        %763 = vmatprep.subr.bf16.mxu0 0
        %764 = vmatpush1.bf16.msra.mxu0 0
        %765 = vmatprep.subr.bf16.mxu0 0
        %766 = vmatpush1.bf16.msra.mxu0 0
        %767 = vmatprep.subr.bf16.mxu0 0
        %768 = vmatpush1.bf16.msra.mxu0 0
        %769 = vmatprep.mubr.bf16.mxu0 0
        %770 = vmatmul.mubr.bf16.gmra.mrb[0].mxu0 %v735
        %v771 = vpop.f32.mrb[0].mxu0
        %v772 = vadd.f32 0.0, %v771
        %v773 = vpop.f32.mrb[0].mxu0
        %v774 = vpop.f32.mrb[0].mxu0
        %v775 = vadd.f32 0.0, %v774
        %v776 = vpop.f32.mrb[0].mxu0
        %777 = vdwg.mxu0
        %v780 = vunpack.c.l.b16 %v598
        %v781 = vunpack.c.l.b16 %v599
        %v782 = vpack.c.b16 %v781, %v780
        %v785 = vsel %vm469, %v597, 0
        %787 = vmatprep.subr.bf16.mxu0 0
        %788 = vmatpush1.bf16.msra.mxu0 %v782
        %789 = vmatprep.subr.bf16.mxu0 0
        %790 = vmatpush1.bf16.msra.mxu0 0
        %791 = vmatprep.subr.bf16.mxu0 0
        %792 = vmatpush1.bf16.msra.mxu0 0
        %793 = vmatprep.subr.bf16.mxu0 0
        %794 = vmatpush1.bf16.msra.mxu0 0
        %795 = vmatprep.subr.bf16.mxu0 0
        %796 = vmatpush1.bf16.msra.mxu0 0
        %797 = vmatprep.subr.bf16.mxu0 0
        %798 = vmatpush1.bf16.msra.mxu0 0
        %799 = vmatprep.subr.bf16.mxu0 0
        %800 = vmatpush1.bf16.msra.mxu0 0
        %801 = vmatprep.subr.bf16.mxu0 0
        %802 = vmatpush1.bf16.msra.mxu0 0
        %803 = vmatprep.subr.bf16.mxu0 0
        %804 = vmatpush1.bf16.msra.mxu0 0
        %805 = vmatprep.subr.bf16.mxu0 0
        %806 = vmatpush1.bf16.msra.mxu0 0
        %807 = vmatprep.subr.bf16.mxu0 0
        %808 = vmatpush1.bf16.msra.mxu0 0
        %809 = vmatprep.subr.bf16.mxu0 0
        %810 = vmatpush1.bf16.msra.mxu0 0
        %811 = vmatprep.subr.bf16.mxu0 0
        %812 = vmatpush1.bf16.msra.mxu0 0
        %813 = vmatprep.subr.bf16.mxu0 0
        %814 = vmatpush1.bf16.msra.mxu0 0
        %815 = vmatprep.subr.bf16.mxu0 0
        %816 = vmatpush1.bf16.msra.mxu0 0
        %817 = vmatprep.subr.bf16.mxu0 0
        %818 = vmatpush1.bf16.msra.mxu0 0
        %819 = vmatprep.mubr.bf16.mxu0 0
        %820 = vmatmul.mubr.bf16.gmra.mrb[0].mxu0 %v785
        %v821 = vpop.f32.mrb[0].mxu0
        %v822 = vadd.f32 %v772, %v821
        %v823 = vpop.f32.mrb[0].mxu0
        %v824 = vpop.f32.mrb[0].mxu0
        %v825 = vadd.f32 %v775, %v824
        %v826 = vpop.f32.mrb[0].mxu0
        %827 = vdwg.mxu0
        %v828 = vlaneseq
        %v829 = vshrl.u32 %v828, 7
        %v830 = vsub.s32 3, %v829
        %v831 = vrot.slane %v226, %v830
        %v832 = vadd.f32 %v822, %v831
        %v833 = vadd.f32 %v825, %v831
        %v834 = vadd.f32 %v398, %v832
        %v835 = vadd.f32 %v399, %v833
        %v836 = vsel %vm360, %v834, 0.0
        %837 = vadd.xlane.f32.xlu0 %v836
        %v838 = vpop.xlane.xlu0 %837
        %v839 = vsel %vm360, %v835, 0.0
        %840 = vadd.xlane.f32.xlu0 %v839
        %v841 = vpop.xlane.xlu0 %840
        %v842 = vmul.f32 %v838, %v367
        %v843 = vmul.f32 %v841, %v367
        %v844 = vsub.f32 %v834, %v842
        %v845 = vsub.f32 %v835, %v843
        %v846 = vmul.f32 %v844, %v844
        %v847 = vmul.f32 %v845, %v845
        %v848 = vsel %vm360, %v846, 0.0
        %849 = vadd.xlane.f32.xlu0 %v848
        %v850 = vpop.xlane.xlu0 %849
        %v851 = vsel %vm360, %v847, 0.0
        %852 = vadd.xlane.f32.xlu0 %v851
        %v853 = vpop.xlane.xlu0 %852
        %v854 = vmul.f32 %v850, %v367
        %v855 = vmul.f32 %v853, %v367
        %v856 = vadd.f32 %v854, 1e-12
        %v857 = vadd.f32 %v855, 1e-12
        %v858 = vrsqrt.pop %v856
        %v859 = vrsqrt.pop %v857
        %v860 = vmul.f32 %v844, %v858
        %v861 = vmul.f32 %v845, %v859
        %v862 = vlaneseq
        %v863 = vshrl.u32 %v862, 7
        %v864 = vsub.s32 4, %v863
        %v865 = vrot.slane %v226, %v864
        %v866 = vmul.f32 %v860, %v865
        %v867 = vmul.f32 %v861, %v865
        %v868 = vlaneseq
        %v869 = vshrl.u32 %v868, 7
        %v870 = vsub.s32 5, %v869
        %v871 = vrot.slane %v226, %v870
        %v872 = vadd.f32 %v866, %v871
        %v873 = vadd.f32 %v867, %v871
        %v874 = vpack.c.bf16 %v873, %v872
        %v875 = vld [vmem:[#allocation2 + $0x50] sm:$0xf]
        %v876 = vld [vmem:[#allocation2 + $0x54] sm:$0xf]
        %v877 = vld [vmem:[#allocation2 + $0x58] sm:$0xf]
        %v878 = vld [vmem:[#allocation2 + $0x5c] sm:$0xf]
        %v879 = vlaneseq
        %v880 = vshrl.u32 %v879, 7
        %v881 = vsub.s32 6, %v880
        %v882 = vrot.slane %v226, %v881
        %v887 = vunpack.c.l.b16 %v875
        %v888 = vunpack.c.l.b16 %v876
        %v889 = vunpack.c.l.b16 %v877
        %v890 = vunpack.c.l.b16 %v878
        %v891 = vpack.c.b16 %v888, %v887
        %v892 = vpack.c.b16 %v890, %v889
        %v896 = vsel %vm360, %v874, 0
        %898 = vmatprep.subr.bf16.mxu0 0
        %899 = vmatpush1.bf16.msra.mxu0 %v891
        %900 = vmatprep.subr.bf16.mxu0 0
        %901 = vmatpush1.bf16.msra.mxu0 %v892
        %902 = vmatprep.subr.bf16.mxu0 0
        %903 = vmatpush1.bf16.msra.mxu0 0
        %904 = vmatprep.subr.bf16.mxu0 0
        %905 = vmatpush1.bf16.msra.mxu0 0
        %906 = vmatprep.subr.bf16.mxu0 0
        %907 = vmatpush1.bf16.msra.mxu0 0
        %908 = vmatprep.subr.bf16.mxu0 0
        %909 = vmatpush1.bf16.msra.mxu0 0
        %910 = vmatprep.subr.bf16.mxu0 0
        %911 = vmatpush1.bf16.msra.mxu0 0
        %912 = vmatprep.subr.bf16.mxu0 0
        %913 = vmatpush1.bf16.msra.mxu0 0
        %914 = vmatprep.subr.bf16.mxu0 0
        %915 = vmatpush1.bf16.msra.mxu0 0
        %916 = vmatprep.subr.bf16.mxu0 0
        %917 = vmatpush1.bf16.msra.mxu0 0
        %918 = vmatprep.subr.bf16.mxu0 0
        %919 = vmatpush1.bf16.msra.mxu0 0
        %920 = vmatprep.subr.bf16.mxu0 0
        %921 = vmatpush1.bf16.msra.mxu0 0
        %922 = vmatprep.subr.bf16.mxu0 0
        %923 = vmatpush1.bf16.msra.mxu0 0
        %924 = vmatprep.subr.bf16.mxu0 0
        %925 = vmatpush1.bf16.msra.mxu0 0
        %926 = vmatprep.subr.bf16.mxu0 0
        %927 = vmatpush1.bf16.msra.mxu0 0
        %928 = vmatprep.subr.bf16.mxu0 0
        %929 = vmatpush1.bf16.msra.mxu0 0
        %930 = vmatprep.mubr.bf16.mxu0 0
        %931 = vmatmul.mubr.bf16.gmra.mrb[0].mxu0 %v896
        %v932 = vpop.f32.mrb[0].mxu0
        %v933 = vadd.f32 %v882, %v932
        %v934 = vpop.f32.mrb[0].mxu0
        %v935 = vpop.f32.mrb[0].mxu0
        %v936 = vadd.f32 %v882, %v935
        %v937 = vpop.f32.mrb[0].mxu0
        %938 = vdwg.mxu0
        %v939 = vmul.f32 %v933, %v933
        %v940 = vmul.f32 %v936, %v936
        %v941 = vmul.f32 %v933, %v939
        %v942 = vmul.f32 %v936, %v940
        %v943 = vmul.f32 %v941, 0.044715
        %v944 = vmul.f32 %v942, 0.044715
        %v945 = vadd.f32 %v933, %v943
        %v946 = vadd.f32 %v936, %v944
        %v947 = vmul.f32 %v945, 0.7978846
        %v948 = vmul.f32 %v946, 0.7978846
        %v949 = vtanh.pop %v947
        %v950 = vtanh.pop %v948
        %v951 = vadd.f32 %v949, 1.0
        %v952 = vadd.f32 %v950, 1.0
        %v953 = vmul.f32 %v951, 0.5
        %v954 = vmul.f32 %v952, 0.5
        %v955 = vmul.f32 %v933, %v953
        %v956 = vmul.f32 %v936, %v954
        %v957 = vpack.c.bf16 %v956, %v955
        %v958 = vld [vmem:[#allocation2 + $0x60] sm:$0xf]
        %v959 = vld [vmem:[#allocation2 + $0x64] sm:$0xf]
        %v960 = vld [vmem:[#allocation2 + $0x68] sm:$0xf]
        %v961 = vld [vmem:[#allocation2 + $0x6c] sm:$0xf]
        %v962 = vld [vmem:[#allocation2 + $0x70] sm:$0xf]
        %v963 = vld [vmem:[#allocation2 + $0x74] sm:$0xf]
        %v964 = vld [vmem:[#allocation2 + $0x78] sm:$0xf]
        %v965 = vld [vmem:[#allocation2 + $0x7c] sm:$0xf]
        %v966 = vlaneseq
        %v967 = vshrl.u32 %v966, 7
        %v968 = vsub.s32 7, %v967
        %v969 = vrot.slane %v226, %v968
        %v978 = vunpack.c.l.b16 %v958
        %v979 = vunpack.c.l.b16 %v959
        %v980 = vunpack.c.l.b16 %v960
        %v981 = vunpack.c.l.b16 %v961
        %v982 = vunpack.c.l.b16 %v962
        %v983 = vunpack.c.l.b16 %v963
        %v984 = vunpack.c.l.b16 %v964
        %v985 = vunpack.c.l.b16 %v965
        %v986 = vpack.c.b16 %v979, %v978
        %v987 = vpack.c.b16 %v981, %v980
        %v988 = vpack.c.b16 %v983, %v982
        %v989 = vpack.c.b16 %v985, %v984
        %vm994 = vcmask 523264
        %v996 = vsel %vm994, %v957, 0
        %998 = vmatprep.subr.bf16.mxu0 0
        %999 = vmatpush1.bf16.msra.mxu0 %v986
        %1000 = vmatprep.subr.bf16.mxu0 0
        %1001 = vmatpush1.bf16.msra.mxu0 %v987
        %1002 = vmatprep.subr.bf16.mxu0 0
        %1003 = vmatpush1.bf16.msra.mxu0 %v988
        %1004 = vmatprep.subr.bf16.mxu0 0
        %1005 = vmatpush1.bf16.msra.mxu0 %v989
        %1006 = vmatprep.subr.bf16.mxu0 0
        %1007 = vmatpush1.bf16.msra.mxu0 0
        %1008 = vmatprep.subr.bf16.mxu0 0
        %1009 = vmatpush1.bf16.msra.mxu0 0
        %1010 = vmatprep.subr.bf16.mxu0 0
        %1011 = vmatpush1.bf16.msra.mxu0 0
        %1012 = vmatprep.subr.bf16.mxu0 0
        %1013 = vmatpush1.bf16.msra.mxu0 0
        %1014 = vmatprep.subr.bf16.mxu0 0
        %1015 = vmatpush1.bf16.msra.mxu0 0
        %1016 = vmatprep.subr.bf16.mxu0 0
        %1017 = vmatpush1.bf16.msra.mxu0 0
        %1018 = vmatprep.subr.bf16.mxu0 0
        %1019 = vmatpush1.bf16.msra.mxu0 0
        %1020 = vmatprep.subr.bf16.mxu0 0
        %1021 = vmatpush1.bf16.msra.mxu0 0
        %1022 = vmatprep.subr.bf16.mxu0 0
        %1023 = vmatpush1.bf16.msra.mxu0 0
        %1024 = vmatprep.subr.bf16.mxu0 0
        %1025 = vmatpush1.bf16.msra.mxu0 0
        %1026 = vmatprep.subr.bf16.mxu0 0
        %1027 = vmatpush1.bf16.msra.mxu0 0
        %1028 = vmatprep.subr.bf16.mxu0 0
        %1029 = vmatpush1.bf16.msra.mxu0 0
        %1030 = vmatprep.mubr.bf16.mxu0 0
        %1031 = vmatmul.mubr.bf16.gmra.mrb[0].mxu0 %v996
        %v1032 = vpop.f32.mrb[0].mxu0
        %v1033 = vadd.f32 %v969, %v1032
        %v1034 = vpop.f32.mrb[0].mxu0
        %v1035 = vpop.f32.mrb[0].mxu0
        %v1036 = vadd.f32 %v969, %v1035
        %v1037 = vpop.f32.mrb[0].mxu0
        %1038 = vdwg.mxu0
        %v1039 = vadd.f32 %v872, %v1033
        %v1040 = vadd.f32 %v873, %v1036
        %v1041 = vsel %vm360, %v1039, 0.0
        %1042 = vadd.xlane.f32.xlu0 %v1041
        %v1043 = vpop.xlane.xlu0 %1042
        %v1044 = vsel %vm360, %v1040, 0.0
        %1045 = vadd.xlane.f32.xlu0 %v1044
        %v1046 = vpop.xlane.xlu0 %1045
        %v1047 = vmul.f32 %v1043, %v367
        %v1048 = vmul.f32 %v1046, %v367
        %v1049 = vsub.f32 %v1039, %v1047
        %v1050 = vsub.f32 %v1040, %v1048
        %v1051 = vmul.f32 %v1049, %v1049
        %v1052 = vmul.f32 %v1050, %v1050
        %v1053 = vsel %vm360, %v1051, 0.0
        %1054 = vadd.xlane.f32.xlu0 %v1053
        %v1055 = vpop.xlane.xlu0 %1054
        %v1056 = vsel %vm360, %v1052, 0.0
        %1057 = vadd.xlane.f32.xlu0 %v1056
        %v1058 = vpop.xlane.xlu0 %1057
        %v1059 = vmul.f32 %v1055, %v367
        %v1060 = vmul.f32 %v1058, %v367
        %v1061 = vadd.f32 %v1059, 1e-12
        %v1062 = vadd.f32 %v1060, 1e-12
        %v1063 = vrsqrt.pop %v1061
        %v1064 = vrsqrt.pop %v1062
        %v1065 = vmul.f32 %v1049, %v1063
        %v1066 = vmul.f32 %v1050, %v1064
        %v1067 = vlaneseq
        %v1068 = vshrl.u32 %v1067, 7
        %v1069 = vsub.s32 0, %v1068
        %v1070 = vrot.slane %v227, %v1069
        %v1071 = vmul.f32 %v1065, %v1070
        %v1072 = vmul.f32 %v1066, %v1070
        %v1073 = vlaneseq
        %v1074 = vshrl.u32 %v1073, 7
        %v1075 = vsub.s32 1, %v1074
        %v1076 = vrot.slane %v227, %v1075
        %v1077 = vadd.f32 %v1071, %v1076
        %v1078 = vadd.f32 %v1072, %v1076
        %v1079 = vpack.c.bf16 %v1078, %v1077
        %v1080 = vld [vmem:[#allocation2 + $0x80] sm:$0xf]
        %v1081 = vld [vmem:[#allocation2 + $0x84] sm:$0xf]
        %v1082 = vld [vmem:[#allocation2 + $0x88] sm:$0xf]
        %v1083 = vld [vmem:[#allocation2 + $0x8c] sm:$0xf]
        %v1084 = vlaneseq
        %v1085 = vshrl.u32 %v1084, 7
        %v1086 = vsub.s32 2, %v1085
        %v1087 = vrot.slane %v227, %v1086
        %v1092 = vunpack.c.l.b16 %v1080
        %v1093 = vunpack.c.l.b16 %v1081
        %v1094 = vunpack.c.l.b16 %v1082
        %v1095 = vunpack.c.l.b16 %v1083
        %v1096 = vpack.c.b16 %v1093, %v1092
        %v1097 = vpack.c.b16 %v1095, %v1094
        %v1101 = vsel %vm360, %v1079, 0
        %1103 = vmatprep.subr.bf16.mxu0 0
        %1104 = vmatpush1.bf16.msra.mxu0 %v1096
        %1105 = vmatprep.subr.bf16.mxu0 0
        %1106 = vmatpush1.bf16.msra.mxu0 %v1097
        %1107 = vmatprep.subr.bf16.mxu0 0
        %1108 = vmatpush1.bf16.msra.mxu0 0
        %1109 = vmatprep.subr.bf16.mxu0 0
        %1110 = vmatpush1.bf16.msra.mxu0 0
        %1111 = vmatprep.subr.bf16.mxu0 0
        %1112 = vmatpush1.bf16.msra.mxu0 0
        %1113 = vmatprep.subr.bf16.mxu0 0
        %1114 = vmatpush1.bf16.msra.mxu0 0
        %1115 = vmatprep.subr.bf16.mxu0 0
        %1116 = vmatpush1.bf16.msra.mxu0 0
        %1117 = vmatprep.subr.bf16.mxu0 0
        %1118 = vmatpush1.bf16.msra.mxu0 0
        %1119 = vmatprep.subr.bf16.mxu0 0
        %1120 = vmatpush1.bf16.msra.mxu0 0
        %1121 = vmatprep.subr.bf16.mxu0 0
        %1122 = vmatpush1.bf16.msra.mxu0 0
        %1123 = vmatprep.subr.bf16.mxu0 0
        %1124 = vmatpush1.bf16.msra.mxu0 0
        %1125 = vmatprep.subr.bf16.mxu0 0
        %1126 = vmatpush1.bf16.msra.mxu0 0
        %1127 = vmatprep.subr.bf16.mxu0 0
        %1128 = vmatpush1.bf16.msra.mxu0 0
        %1129 = vmatprep.subr.bf16.mxu0 0
        %1130 = vmatpush1.bf16.msra.mxu0 0
        %1131 = vmatprep.subr.bf16.mxu0 0
        %1132 = vmatpush1.bf16.msra.mxu0 0
        %1133 = vmatprep.subr.bf16.mxu0 0
        %1134 = vmatpush1.bf16.msra.mxu0 0
        %1135 = vmatprep.mubr.bf16.mxu0 0
        %1136 = vmatmul.mubr.bf16.gmra.mrb[0].mxu0 %v1101
        %v1137 = vpop.f32.mrb[0].mxu0
        %v1138 = vadd.f32 %v1087, %v1137
        %v1139 = vpop.f32.mrb[0].mxu0
        %v1140 = vpop.f32.mrb[0].mxu0
        %v1141 = vadd.f32 %v1087, %v1140
        %v1142 = vpop.f32.mrb[0].mxu0
        %1143 = vdwg.mxu0
        %v1144 = vtanh.pop %v1138
        %v1145 = vtanh.pop %v1141
        %1148 = vrot.lane.b32.xlu0 %v1077, 32
        %v1149 = vpop.permute.xlu0 %1148
        %1150 = vrot.lane.b32.xlu0 %v1078, 32
        %v1151 = vpop.permute.xlu0 %1150
        %1156 = vrot.lane.b32.xlu0 %v1144, 64
        %v1157 = vpop.permute.xlu0 %1156
        %1158 = vrot.lane.b32.xlu0 %v1145, 64
        %v1159 = vpop.permute.xlu0 %1158
        %1162 = vrot.lane.b32.xlu0 %v1144, 96
        %v1163 = vpop.permute.xlu0 %1162
        %1164 = vrot.lane.b32.xlu0 %v1145, 96
        %v1165 = vpop.permute.xlu0 %1164
        %v1168 = vsel %vm360, %v398, %v1149
        %v1169 = vsel %vm360, %v399, %v1151
        %v1170 = vsel %vm994, %v1168, %v1157
        %v1171 = vsel %vm994, %v1169, %v1159
        %v1172 = vsel %vm315, %v1170, %v1163
        %v1173 = vsel %vm315, %v1171, %v1165
        %1174 = vst [vmem:[%s216] sm:$0xff] %v1172
        %1175 = vst [vmem:[%s216 + $0x8] sm:$0xff] %v1173
        %s1176 = sand.u32 %s121, 1
        %s1177 = scalar_lea.sflag [#allocation4], %s1176
        %s1178 = sand.u32 %s121, 1
        %s1179 = smul.addr %s1178, 16
        %s1180 = scalar_lea.vmem [#allocation5], %s1179
        // Predicated region
        $region41: #{tpu_custom_call.1} parent=35 // pred_check
          %p1181 = pneg %p131
        $region42: #{tpu_custom_call.1} parent=35 // pred_check_branch
          %1183 = sbr.rel (%p1181) target = $region44
        $region43: #{tpu_custom_call.1} parent=35 // pred_region
          %s1185 = ssub.s32 256, 256
          %1186 = vsyncadd %s1177, %s1185
          %s1187 = smul.addr %s19, 2
          %s1188 = smul.addr %s1187, 128
          %s1189 = scalar_lea.hbm %s4, %s1188
          %s1190 = sshll.u32 %s1180, 4
          %s1191 = int_to_ptr.vmem [resolvable:$true] %s1190
          %1196 = dma.vmem_to_hbm [thread:$0]  %s1191, 256, %s1189, %s1177, 128, 128, 8
        $region44: #{tpu_custom_call.1} parent=35 // pred_fallthru
          _
      $region36: #{tpu_custom_call.1} parent=5 // pred_fallthru
        _
      %p1197 = scmp.le.s32.totalorder 2, %s14
      // Predicated region
      $region45: #{tpu_custom_call.1} parent=5 // pred_check
        %p1198 = pneg %p1197
      $region46: #{tpu_custom_call.1} parent=5 // pred_check_branch
        %1200 = sbr.rel (%p1198) target = $region48
      $region47: #{tpu_custom_call.1} parent=5 // pred_region
        %s1201 = ssub.s32 %s14, 2
        // Predicated region
        $region49: #{tpu_custom_call.1} parent=47 // pred_check
          %p1202 = pneg %p137
        $region50: #{tpu_custom_call.1} parent=47 // pred_check_branch
          %1204 = sbr.rel (%p1202) target = $region52
        $region51: #{tpu_custom_call.1} parent=47 // pred_region
          %s1205 = sand.u32 %s122, 1
          %s1206 = scalar_lea.sflag [#allocation4], %s1205
          %s1207 = sand.u32 %s122, 1
          %s1208 = smul.addr %s1207, 16
          %s1209 = scalar_lea.vmem [#allocation5], %s1208
          %1210 = dma.done %s1206, 256
        $region52: #{tpu_custom_call.1} parent=47 // pred_fallthru
          _
      $region48: #{tpu_custom_call.1} parent=5 // pred_fallthru
        _
    $region6: #{tpu_custom_call.1} parent=1 // loop_footer
      %s18 = sadd.s32 1, %s14
    $region7: #{tpu_custom_call.1} parent=1 // loop_footer_branch
      %13 = sbr.rel target = $region3
    $region8: #{tpu_custom_call.1} parent=1 // loop_exit
      _
    %1211 = vsyncpa [#allocation3], 1
    %s1212 = scalar_lea.sflag [#allocation3], 1
    %1213 = vsyncpa %s1212, 1
    %1214 = vsyncpa [#allocation4], 1
    %s1215 = scalar_lea.sflag [#allocation4], 1
    %1216 = vsyncpa %s1215, 1

</llo_original>
